<compile_context>
chip_gen: v7x
topology: tpu7x:2x2x1
jax: 0.10.0
libtpu: 0.0.40
codegen_flags: <defaults>
</compile_context>

<pallas_src>
import functools

import jax
import jax.numpy as jnp
from jax.experimental import pallas as pl
from jax.experimental.pallas import tpu as pltpu

K = 5   # kernel size
P = 2   # padding


def _plane_operator(conv_w, H, W):
    """Fold the (kh, kw) taps + H/W zero padding into K banded matmul operators.

    conv_w: (K, K, K, Cin, Cout)  ->  (K, H*W*Cin, H*W*Cout) with
      out[kd, (h_in*W+w_in)*Cin+ci, (h*W+w)*Cout+co] =
        conv_w[kd, h_in-h+P, w_in-w+P, ci, co]  if that offset lies inside the kernel
        0                                        otherwise (implicit zero padding)
    """
    _, _, _, Cin, Cout = conv_w.shape
    hi = jnp.arange(H)
    wi = jnp.arange(W)
    dh = hi[:, None] - hi[None, :] + P                       # (H_in, H_out)
    dw = wi[:, None] - wi[None, :] + P                       # (W_in, W_out)
    valid = (((dh >= 0) & (dh < K))[:, :, None, None]
             & ((dw >= 0) & (dw < K))[None, None, :, :])     # (H, H, W, W)
    dh_c = jnp.clip(dh, 0, K - 1)
    dw_c = jnp.clip(dw, 0, K - 1)
    # g[kd, h_in, h_out, w_in, w_out, ci, co]
    g = conv_w[:, dh_c[:, :, None, None], dw_c[None, None, :, :], :, :]
    g = g * valid[None, :, :, :, :, None, None].astype(conv_w.dtype)
    # -> (kd, h_in, w_in, ci, h_out, w_out, co)
    g = g.transpose(0, 1, 3, 5, 2, 4, 6)
    return g.reshape(K, H * W * Cin, H * W * Cout)


def prepare_vgg_block2_params(bn_gamma, bn_beta, bn_mean, bn_var, conv_w, H, W,
                              *, eps=1e-3):
    """One-time, weight-load-time preprocessing.  Call once and cache the result.

    The ~K*(H*W)^2*Cin*Cout-element gather/transpose here must NOT be re-run per forward
    call (it would dominate wall clock for this small module).
    """
    _, _, _, Cin, Cout = conv_w.shape
    L_in = H * W * Cin
    L_out = H * W * Cout

    # Fold BN running stats + affine into scale/bias (inference mode), tiled to the
    # lane-dense H*W*Cin layout so the in-kernel affine is a full-width f32 VPU op.
    scale = (bn_gamma / jnp.sqrt(bn_var + eps)).astype(jnp.float32)
    bias = (bn_beta - bn_mean * scale).astype(jnp.float32)
    scale_t = jnp.tile(scale, H * W).reshape(1, L_in)
    bias_t = jnp.tile(bias, H * W).reshape(1, L_in)

    # Matmul-ready fused operator: (K, L_in, L_out) -> (K*L_in, L_out), bf16.
    # (Weight bytes are the dominant HBM traffic; bf16 halves them.  Accumulation stays f32.)
    w_mat = _plane_operator(conv_w.astype(jnp.float32), H, W)
    w_mat = w_mat.reshape(K * L_in, L_out).astype(jnp.bfloat16)
    return scale_t, bias_t, w_mat


def _vgg_block2_kernel(x_ref, scale_ref, bias_ref, w_ref, o_ref, ypad_ref,
                       *, N, D, L_in):
    """Single grid step: whole batch at once.

    x_ref    : (N*D, L_in)      f32   lane-dense input rows, L_in = H*W*Cin
    scale_ref: (1, L_in)        f32   folded BN scale (tiled over H*W)
    bias_ref : (1, L_in)        f32   folded BN bias
    w_ref    : (K*L_in, L_out)  bf16  fused depth-tap x plane operator
    o_ref    : (N*D, L_out)     f32   output rows, L_out = H*W*Cout
    ypad_ref : (N, D+2P, L_in)  bf16  scratch: relu(bn(x)), zero-padded along depth
    """
    # BatchNorm (inference affine) + ReLU: one lane-dense f32 VPU pass over all rows.
    y = jnp.maximum(x_ref[...] * scale_ref[...] + bias_ref[...], 0.0)   # (N*D, L_in)

    # Depth-padded bf16 scratch (only the halo planes strictly need zeroing; a full
    # zero of this ~12 KB buffer is simpler and still trivially cheap).
    ypad_ref[...] = jnp.zeros_like(ypad_ref)
    for n in range(N):
        ypad_ref[n, P:P + D, :] = y[n * D:(n + 1) * D, :].astype(ypad_ref.dtype)

    # Depth im2col: one (N*D, K*L_in) LHS so the whole conv is a SINGLE MXU matmul
    # with contraction K*L_in (the (kh, kw) taps and H/W zero padding already live
    # inside w_ref; only the depth shift is materialized here).
    lhs = jnp.concatenate(
        [jnp.concatenate([ypad_ref[n, kd:kd + D, :] for kd in range(K)], axis=1)
         for n in range(N)],
        axis=0)                                                         # (N*D, K*L_in) bf16

    # bf16 x bf16 -> f32 accumulation inside the MXU (MRB in-place accumulate on v7x).
    o_ref[...] = jnp.dot(lhs, w_ref[...], preferred_element_type=jnp.float32)


@jax.jit
def vgg_block2_apply(x, scale_t, bias_t, w_mat):
    """x: (N, D, H, W, Cin) float32; scale_t/bias_t/w_mat from prepare_vgg_block2_params."""
    N, D, H, W, Cin = x.shape
    L_in = H * W * Cin
    L_out = w_mat.shape[1]
    Cout = L_out // (H * W)
    assert w_mat.shape[0] == K * L_in and L_out == H * W * Cout

    # Lane-dense activation view (contiguous reshape, no data movement).
    x2 = x.reshape(N * D, L_in).astype(jnp.float32)

    kernel = functools.partial(_vgg_block2_kernel, N=N, D=D, L_in=L_in)

    out = pl.pallas_call(
        kernel,
        out_shape=jax.ShapeDtypeStruct((N * D, L_out), jnp.float32),
        grid_spec=pltpu.PrefetchScalarGridSpec(
            num_scalar_prefetch=0,
            # Single grid step: batch is folded into the matmul M dimension.  This halves
            # per-step overhead on single-TC v5e/v6e and avoids duplicating the
            # weight-operator DMA on both v7x TensorCores (the kernel is weight-DMA-bound).
            grid=(1,),
            in_specs=[
                pl.BlockSpec((N * D, L_in), lambda i: (0, 0)),
                pl.BlockSpec((1, L_in), lambda i: (0, 0)),
                pl.BlockSpec((1, L_in), lambda i: (0, 0)),
                pl.BlockSpec((K * L_in, L_out), lambda i: (0, 0)),
            ],
            out_specs=pl.BlockSpec((N * D, L_out), lambda i: (0, 0)),
            scratch_shapes=[
                pltpu.VMEM((N, D + 2 * P, L_in), jnp.bfloat16),
            ],
        ),
        compiler_params=pltpu.CompilerParams(
            dimension_semantics=("arbitrary",),
            vmem_limit_bytes=32 * 1024 * 1024),
    )(x2, scale_t, bias_t, w_mat)

    return out.reshape(N, D, H, W, Cout)


def vgg_block2_reference(x, bn_gamma, bn_beta, bn_mean, bn_var, conv_w,
                         *, eps=1e-3, cast_bf16=False):
    """Dense reference: BN (inference) -> ReLU -> zero-padded 5x5x5 conv (no bias).

    cast_bf16=True rounds the conv operands to bf16 (f32 accumulation) to match the
    kernel's precision for a tight structural check.
    """
    scale = bn_gamma / jnp.sqrt(bn_var + eps)
    bias = bn_beta - bn_mean * scale
    y = jnp.maximum(x * scale[None, None, None, None, :]
                    + bias[None, None, None, None, :], 0.0)
    w = conv_w
    if cast_bf16:
        y = y.astype(jnp.bfloat16).astype(jnp.float32)
        w = w.astype(jnp.bfloat16).astype(jnp.float32)
    return jax.lax.conv_general_dilated(
        y, w,
        window_strides=(1, 1, 1),
        padding=((P, P), (P, P), (P, P)),
        dimension_numbers=("NDHWC", "DHWIO", "NDHWC"),
        precision=jax.lax.Precision.HIGHEST,
    )


if __name__ == "__main__":
    # Small shapes: batch=2, Cin=4, Cout=8, spatial 8x8x8.
    # (PyTorch-equivalent input: NCDHW = [2, 4, 8, 8, 8].)
    N, D, H, W, Cin, Cout = 2, 8, 8, 8, 4, 8

    key = jax.random.PRNGKey(0)
    kx, kg, kb, km, kv, kw = jax.random.split(key, 6)

    x = jax.random.normal(kx, (N, D, H, W, Cin), dtype=jnp.float32)

    # Deterministic "parameters" (synthetic, not a checkpoint).
    bn_gamma = 1.0 + 0.1 * jax.random.normal(kg, (Cin,), dtype=jnp.float32)
    bn_beta = 0.1 * jax.random.normal(kb, (Cin,), dtype=jnp.float32)
    bn_mean = 0.1 * jax.random.normal(km, (Cin,), dtype=jnp.float32)
    bn_var = jnp.abs(jax.random.normal(kv, (Cin,), dtype=jnp.float32)) + 0.5
    conv_w = 0.05 * jax.random.normal(kw, (K, K, K, Cin, Cout), dtype=jnp.float32)

    # One-time weight preprocessing (hoisted out of the per-call hot path; cache these).
    scale_t, bias_t, w_mat = jax.block_until_ready(
        prepare_vgg_block2_params(bn_gamma, bn_beta, bn_mean, bn_var, conv_w, H, W))

    out = vgg_block2_apply(x, scale_t, bias_t, w_mat)
    out = jax.block_until_ready(out)
    assert out.shape == (N, D, H, W, Cout), out.shape

    # Tight structural check against a precision-matched (bf16 operands, f32 accum) reference.
    ref16 = vgg_block2_reference(x, bn_gamma, bn_beta, bn_mean, bn_var, conv_w,
                                 cast_bf16=True)
    ref16 = jax.block_until_ready(ref16)
    assert jnp.allclose(out, ref16, atol=2e-3, rtol=2e-3), (
        float(jnp.max(jnp.abs(out - ref16))))

    # Semantic check against the full-f32 module (tolerance covers the bf16 weight cast).
    ref32 = vgg_block2_reference(x, bn_gamma, bn_beta, bn_mean, bn_var, conv_w)
    ref32 = jax.block_until_ready(ref32)
    assert jnp.allclose(out, ref32, atol=3e-2, rtol=3e-2), (
        float(jnp.max(jnp.abs(out - ref32))))

    print("KERNEL_OK")
</pallas_src>

<mosaic_0001>
module attributes {stable_mosaic.version = 11 : i64} {
  func.func @_vgg_block2_kernel(%arg0: i32, %arg1: memref<16x256xf32, #tpu.memory_space<vmem>>, %arg2: memref<1x256xf32, #tpu.memory_space<vmem>>, %arg3: memref<1x256xf32, #tpu.memory_space<vmem>>, %arg4: memref<1280x512xbf16, #tpu.memory_space<vmem>>, %arg5: memref<16x512xf32, #tpu.memory_space<vmem>>, %arg6: memref<2x12x256xbf16, #tpu.memory_space<vmem>>) attributes {dimension_semantics = [#tpu.dimension_semantics<arbitrary>], iteration_bounds = array<i64: 1>, scalar_prefetch = 0 : i64, scratch_operands = 1 : i64, tpu.core_type = #tpu.core_type<tc>, window_params = [{pipeline_mode = #tpu.pipeline_mode<synchronous>, transform_indices = @transform_0, window_bounds = array<i64: 16, 256>}, {pipeline_mode = #tpu.pipeline_mode<synchronous>, transform_indices = @transform_1, window_bounds = array<i64: 1, 256>}, {pipeline_mode = #tpu.pipeline_mode<synchronous>, transform_indices = @transform_2, window_bounds = array<i64: 1, 256>}, {pipeline_mode = #tpu.pipeline_mode<synchronous>, transform_indices = @transform_3, window_bounds = array<i64: 1280, 512>}, {pipeline_mode = #tpu.pipeline_mode<synchronous>, transform_indices = @transform_4, window_bounds = array<i64: 16, 512>}]} {
    %c0 = arith.constant 0 : index
    %c0_0 = arith.constant 0 : index
    %0 = vector.load %arg1[%c0, %c0_0] : memref<16x256xf32, #tpu.memory_space<vmem>>, vector<16x256xf32>
    %c0_1 = arith.constant 0 : index
    %c0_2 = arith.constant 0 : index
    %1 = vector.load %arg2[%c0_1, %c0_2] : memref<1x256xf32, #tpu.memory_space<vmem>>, vector<1x256xf32>
    %2 = vector.broadcast %1 : vector<1x256xf32> to vector<16x256xf32>
    %3 = arith.mulf %0, %2 : vector<16x256xf32>
    %c0_3 = arith.constant 0 : index
    %c0_4 = arith.constant 0 : index
    %4 = vector.load %arg3[%c0_3, %c0_4] : memref<1x256xf32, #tpu.memory_space<vmem>>, vector<1x256xf32>
    %5 = vector.broadcast %4 : vector<1x256xf32> to vector<16x256xf32>
    %6 = arith.addf %3, %5 : vector<16x256xf32>
    %cst = arith.constant 0.000000e+00 : f32
    %7 = vector.broadcast %cst : f32 to vector<16x256xf32>
    %8 = arith.maximumf %6, %7 : vector<16x256xf32>
    %cst_5 = arith.constant 0.000000e+00 : bf16
    %9 = vector.broadcast %cst_5 : bf16 to vector<2x12x256xbf16>
    %c0_6 = arith.constant 0 : index
    %c0_7 = arith.constant 0 : index
    %c0_8 = arith.constant 0 : index
    %10 = vector.load %arg6[%c0_6, %c0_7, %c0_8] : memref<2x12x256xbf16, #tpu.memory_space<vmem>>, vector<2x12x256xbf16>
    tpu.vector_store %arg6[%c0_6, %c0_7, %c0_8], %9 {strides = array<i32>} : memref<2x12x256xbf16, #tpu.memory_space<vmem>>, vector<2x12x256xbf16>,
    %11 = vector.extract_strided_slice %8 {offsets = [0, 0], sizes = [8, 256], strides = [1, 1]} : vector<16x256xf32> to vector<8x256xf32>
    %12 = arith.truncf %11 : vector<8x256xf32> to vector<8x256xbf16>
    %c0_9 = arith.constant 0 : index
    %c2 = arith.constant 2 : index
    %c0_10 = arith.constant 0 : index
    %13 = vector.load %arg6[%c0_9, %c2, %c0_10] : memref<2x12x256xbf16, #tpu.memory_space<vmem>>, vector<1x8x256xbf16>
    %14 = vector.shape_cast %13 : vector<1x8x256xbf16> to vector<8x256xbf16>
    %15 = vector.shape_cast %12 : vector<8x256xbf16> to vector<1x8x256xbf16>
    tpu.vector_store %arg6[%c0_9, %c2, %c0_10], %15 {strides = array<i32>} : memref<2x12x256xbf16, #tpu.memory_space<vmem>>, vector<1x8x256xbf16>,
    %16 = vector.extract_strided_slice %8 {offsets = [8, 0], sizes = [8, 256], strides = [1, 1]} : vector<16x256xf32> to vector<8x256xf32>
    %17 = arith.truncf %16 : vector<8x256xf32> to vector<8x256xbf16>
    %c1 = arith.constant 1 : index
    %c2_11 = arith.constant 2 : index
    %c0_12 = arith.constant 0 : index
    %18 = vector.load %arg6[%c1, %c2_11, %c0_12] : memref<2x12x256xbf16, #tpu.memory_space<vmem>>, vector<1x8x256xbf16>
    %19 = vector.shape_cast %18 : vector<1x8x256xbf16> to vector<8x256xbf16>
    %20 = vector.shape_cast %17 : vector<8x256xbf16> to vector<1x8x256xbf16>
    tpu.vector_store %arg6[%c1, %c2_11, %c0_12], %20 {strides = array<i32>} : memref<2x12x256xbf16, #tpu.memory_space<vmem>>, vector<1x8x256xbf16>,
    %c0_13 = arith.constant 0 : index
    %c0_14 = arith.constant 0 : index
    %c0_15 = arith.constant 0 : index
    %21 = vector.load %arg6[%c0_13, %c0_14, %c0_15] : memref<2x12x256xbf16, #tpu.memory_space<vmem>>, vector<1x8x256xbf16>
    %22 = vector.shape_cast %21 : vector<1x8x256xbf16> to vector<8x256xbf16>
    %c0_16 = arith.constant 0 : index
    %c1_17 = arith.constant 1 : index
    %c0_18 = arith.constant 0 : index
    %23 = vector.load %arg6[%c0_16, %c1_17, %c0_18] : memref<2x12x256xbf16, #tpu.memory_space<vmem>>, vector<1x8x256xbf16>
    %24 = vector.shape_cast %23 : vector<1x8x256xbf16> to vector<8x256xbf16>
    %c0_19 = arith.constant 0 : index
    %c2_20 = arith.constant 2 : index
    %c0_21 = arith.constant 0 : index
    %25 = vector.load %arg6[%c0_19, %c2_20, %c0_21] : memref<2x12x256xbf16, #tpu.memory_space<vmem>>, vector<1x8x256xbf16>
    %26 = vector.shape_cast %25 : vector<1x8x256xbf16> to vector<8x256xbf16>
    %c0_22 = arith.constant 0 : index
    %c3 = arith.constant 3 : index
    %c0_23 = arith.constant 0 : index
    %27 = vector.load %arg6[%c0_22, %c3, %c0_23] : memref<2x12x256xbf16, #tpu.memory_space<vmem>>, vector<1x8x256xbf16>
    %28 = vector.shape_cast %27 : vector<1x8x256xbf16> to vector<8x256xbf16>
    %c0_24 = arith.constant 0 : index
    %c4 = arith.constant 4 : index
    %c0_25 = arith.constant 0 : index
    %29 = vector.load %arg6[%c0_24, %c4, %c0_25] : memref<2x12x256xbf16, #tpu.memory_space<vmem>>, vector<1x8x256xbf16>
    %30 = vector.shape_cast %29 : vector<1x8x256xbf16> to vector<8x256xbf16>
    %31 = tpu.concatenate %22, %24, %26, %28, %30 in 1 : vector<8x256xbf16>, vector<8x256xbf16>, vector<8x256xbf16>, vector<8x256xbf16>, vector<8x256xbf16> -> vector<8x1280xbf16>
    %c1_26 = arith.constant 1 : index
    %c0_27 = arith.constant 0 : index
    %c0_28 = arith.constant 0 : index
    %32 = vector.load %arg6[%c1_26, %c0_27, %c0_28] : memref<2x12x256xbf16, #tpu.memory_space<vmem>>, vector<1x8x256xbf16>
    %33 = vector.shape_cast %32 : vector<1x8x256xbf16> to vector<8x256xbf16>
    %c1_29 = arith.constant 1 : index
    %c1_30 = arith.constant 1 : index
    %c0_31 = arith.constant 0 : index
    %34 = vector.load %arg6[%c1_29, %c1_30, %c0_31] : memref<2x12x256xbf16, #tpu.memory_space<vmem>>, vector<1x8x256xbf16>
    %35 = vector.shape_cast %34 : vector<1x8x256xbf16> to vector<8x256xbf16>
    %c1_32 = arith.constant 1 : index
    %c2_33 = arith.constant 2 : index
    %c0_34 = arith.constant 0 : index
    %36 = vector.load %arg6[%c1_32, %c2_33, %c0_34] : memref<2x12x256xbf16, #tpu.memory_space<vmem>>, vector<1x8x256xbf16>
    %37 = vector.shape_cast %36 : vector<1x8x256xbf16> to vector<8x256xbf16>
    %c1_35 = arith.constant 1 : index
    %c3_36 = arith.constant 3 : index
    %c0_37 = arith.constant 0 : index
    %38 = vector.load %arg6[%c1_35, %c3_36, %c0_37] : memref<2x12x256xbf16, #tpu.memory_space<vmem>>, vector<1x8x256xbf16>
    %39 = vector.shape_cast %38 : vector<1x8x256xbf16> to vector<8x256xbf16>
    %c1_38 = arith.constant 1 : index
    %c4_39 = arith.constant 4 : index
    %c0_40 = arith.constant 0 : index
    %40 = vector.load %arg6[%c1_38, %c4_39, %c0_40] : memref<2x12x256xbf16, #tpu.memory_space<vmem>>, vector<1x8x256xbf16>
    %41 = vector.shape_cast %40 : vector<1x8x256xbf16> to vector<8x256xbf16>
    %42 = tpu.concatenate %33, %35, %37, %39, %41 in 1 : vector<8x256xbf16>, vector<8x256xbf16>, vector<8x256xbf16>, vector<8x256xbf16>, vector<8x256xbf16> -> vector<8x1280xbf16>
    %43 = tpu.concatenate %31, %42 in 0 : vector<8x1280xbf16>, vector<8x1280xbf16> -> vector<16x1280xbf16>
    %c0_41 = arith.constant 0 : index
    %c0_42 = arith.constant 0 : index
    %44 = vector.load %arg4[%c0_41, %c0_42] : memref<1280x512xbf16, #tpu.memory_space<vmem>>, vector<1280x512xbf16>
    %cst_43 = arith.constant dense<0.000000e+00> : vector<16x512xf32>
    %45 = tpu.matmul %43, %44, %cst_43 {dimension_numbers = #tpu.dot_dimension_numbers<[1], [0], [0], [1], [0, 0, 1, 1], [], []>} : vector<16x1280xbf16>, vector<1280x512xbf16>, vector<16x512xf32> -> vector<16x512xf32>
    %c0_44 = arith.constant 0 : index
    %c0_45 = arith.constant 0 : index
    %46 = vector.load %arg5[%c0_44, %c0_45] : memref<16x512xf32, #tpu.memory_space<vmem>>, vector<16x512xf32>
    tpu.vector_store %arg5[%c0_44, %c0_45], %45 {strides = array<i32>} : memref<16x512xf32, #tpu.memory_space<vmem>>, vector<16x512xf32>,
    return
  }
  func.func @transform_0(%arg0: i32) -> (i32, i32) {
    %c0_i32 = arith.constant 0 : i32
    %c0_i32_0 = arith.constant 0 : i32
    %c0_i32_1 = arith.constant 0 : i32
    return %c0_i32, %c0_i32_0 : i32, i32
  }
  func.func @transform_1(%arg0: i32) -> (i32, i32) {
    %c0_i32 = arith.constant 0 : i32
    %c0_i32_0 = arith.constant 0 : i32
    %c0_i32_1 = arith.constant 0 : i32
    return %c0_i32, %c0_i32_0 : i32, i32
  }
  func.func @transform_2(%arg0: i32) -> (i32, i32) {
    %c0_i32 = arith.constant 0 : i32
    %c0_i32_0 = arith.constant 0 : i32
    %c0_i32_1 = arith.constant 0 : i32
    return %c0_i32, %c0_i32_0 : i32, i32
  }
  func.func @transform_3(%arg0: i32) -> (i32, i32) {
    %c0_i32 = arith.constant 0 : i32
    %c0_i32_0 = arith.constant 0 : i32
    %c0_i32_1 = arith.constant 0 : i32
    return %c0_i32, %c0_i32_0 : i32, i32
  }
  func.func @transform_4(%arg0: i32) -> (i32, i32) {
    %c0_i32 = arith.constant 0 : i32
    %c0_i32_0 = arith.constant 0 : i32
    %c0_i32_1 = arith.constant 0 : i32
    return %c0_i32, %c0_i32_0 : i32, i32
  }
}

</mosaic_0001>

<llo_original>
// kernel: vgg_block2_apply.1
$region0: #{vgg_block2_apply.1}
  #allocation0 [shape = 'u32[]', space=smem, size = 0x4, offset = 0x4, fixed_abs, tag = 'smem constant byte address 0x4 - core index']
  #allocation1 [shape = 'u32[144,128]{1,0:T(1,128)}', space=vmem, size = 0x12000, scoped, tag = 'internal scratch']
  #allocation2 [shape = 'bf16[2,12,256]{2,1,0:T(8,128)(2,1)}', space=vmem, size = 0x4000, scoped, tag = 'scratch operand']
  %s0 = inlined_call_operand.vmem [shape: f32[16,256], index: 0, kind: input, shape index: {}]
  %s1 = inlined_call_operand.hbm [shape: f32[1,256], index: 1, kind: input, shape index: {}]
  %s2 = inlined_call_operand.hbm [shape: f32[1,256], index: 2, kind: input, shape index: {}]
  %s3 = inlined_call_operand.hbm [shape: bf16[1280,512], index: 3, kind: input, shape index: {}]
  %s4 = inlined_call_operand.vmem [shape: f32[16,512], index: 4, kind: output, shape index: {}]
  %s5 = sld [smem:[#allocation0]]
  $region38: #{vgg_block2_apply.1} parent=0
    _
  %s7 = ssub.s32 1, %s5
  %s8 = scalar_select 0, %s7, %s5
  $region1: #{vgg_block2_apply.1} parent=0
    #allocation3 [shape = 'u8[1024]{0}', space=vmem, size = 0x400, scoped, tag = 'input window, operand 1, single buffered']
    #allocation4 [shape = 's32[1]{0}', space=sflag, size = 0x4, scoped, tag = 'scoped memory for vgg_block2_apply.1']
    #allocation5 [shape = 'u8[1024]{0}', space=vmem, size = 0x400, scoped, tag = 'input window, operand 2, single buffered']
    #allocation6 [shape = 's32[1]{0}', space=sflag, size = 0x4, scoped, tag = 'scoped memory for vgg_block2_apply.1']
    #allocation7 [shape = 'u8[1310720]{0}', space=vmem, size = 0x140000, scoped, tag = 'input window, operand 3, single buffered']
    %9 = vsyncpa [#allocation4], 0
    %10 = vsyncpa [#allocation6], 0
    // Predicated region
    $region2: #{vgg_block2_apply.1} parent=1 // pred_check
      _
    $region3: #{vgg_block2_apply.1} parent=1 // pred_check_branch
      %12 = sbr.rel (0) target = $region5
    $region4: #{vgg_block2_apply.1} parent=1 // pred_region
      _
    $region5: #{vgg_block2_apply.1} parent=1 // pred_fallthru
      _
    // Predicated region
    $region6: #{vgg_block2_apply.1} parent=1 // pred_check
      _
    $region7: #{vgg_block2_apply.1} parent=1 // pred_check_branch
      %14 = sbr.rel (0) target = $region9
    $region8: #{vgg_block2_apply.1} parent=1 // pred_region
      %s16 = ssub.s32 32, 32
      %17 = vsyncadd [#allocation4], %s16
      %s19 = sshll.u32 [#allocation3], 4
      %s20 = int_to_ptr.vmem [resolvable:$true] %s19
      %22 = dma.hbm_to_vmem [thread:$0]  %s1, 32, %s20, [#allocation4]
    $region9: #{vgg_block2_apply.1} parent=1 // pred_fallthru
      _
    // Predicated region
    $region10: #{vgg_block2_apply.1} parent=1 // pred_check
      _
    $region11: #{vgg_block2_apply.1} parent=1 // pred_check_branch
      %24 = sbr.rel (0) target = $region13
    $region12: #{vgg_block2_apply.1} parent=1 // pred_region
      %s26 = ssub.s32 32, 32
      %27 = vsyncadd [#allocation6], %s26
      %s29 = sshll.u32 [#allocation5], 4
      %s30 = int_to_ptr.vmem [resolvable:$true] %s29
      %32 = dma.hbm_to_vmem [thread:$0]  %s2, 32, %s30, [#allocation6]
    $region13: #{vgg_block2_apply.1} parent=1 // pred_fallthru
      _
    // Predicated region
    $region14: #{vgg_block2_apply.1} parent=1 // pred_check
      _
    $region15: #{vgg_block2_apply.1} parent=1 // pred_check_branch
      %34 = sbr.rel (0) target = $region17
    $region16: #{vgg_block2_apply.1} parent=1 // pred_region
      %s36 = ssub.s32 40960, 40960
      %37 = vsyncadd [#allocation6], %s36
      %s38 = sshll.u32 [#allocation7], 4
      %s39 = int_to_ptr.vmem [resolvable:$true] %s38
      %44 = dma.hbm_to_vmem [thread:$0]  %s3, 40960, %s39, [#allocation6], 256, 256, 16
    $region17: #{vgg_block2_apply.1} parent=1 // pred_fallthru
      _
    // Predicated region
    $region18: #{vgg_block2_apply.1} parent=1 // pred_check
      _
    $region19: #{vgg_block2_apply.1} parent=1 // pred_check_branch
      %46 = sbr.rel (0) target = $region21
    $region20: #{vgg_block2_apply.1} parent=1 // pred_region
      %47 = dma.done [#allocation4], 32
    $region21: #{vgg_block2_apply.1} parent=1 // pred_fallthru
      _
    // Predicated region
    $region22: #{vgg_block2_apply.1} parent=1 // pred_check
      _
    $region23: #{vgg_block2_apply.1} parent=1 // pred_check_branch
      %49 = sbr.rel (0) target = $region25
    $region24: #{vgg_block2_apply.1} parent=1 // pred_region
      %50 = dma.done [#allocation6], 32
    $region25: #{vgg_block2_apply.1} parent=1 // pred_fallthru
      _
    // Predicated region
    $region26: #{vgg_block2_apply.1} parent=1 // pred_check
      _
    $region27: #{vgg_block2_apply.1} parent=1 // pred_check_branch
      %52 = sbr.rel (0) target = $region29
    $region28: #{vgg_block2_apply.1} parent=1 // pred_region
      %53 = dma.done [#allocation6], 40960
    $region29: #{vgg_block2_apply.1} parent=1 // pred_fallthru
      _
    %v55 = vld [vmem:[%s0] sm:$0xff]
    %v56 = vld [vmem:[%s0 + $0x8] sm:$0xff]
    %v57 = vld [vmem:[%s0 + $0x10] sm:$0xff]
    %v58 = vld [vmem:[%s0 + $0x18] sm:$0xff]
    %v59 = vld [vmem:[#allocation3] sm:$0x3]
    %v61 = vlaneseq
    %v62 = vshrl.u32 %v61, 7
    %v63 = vsub.s32 0, %v62
    %v64 = vrot.slane %v59, %v63
    %v65 = vlaneseq
    %v66 = vshrl.u32 %v65, 7
    %v67 = vsub.s32 1, %v66
    %v68 = vrot.slane %v59, %v67
    %v71 = vmul.f32 %v55, %v64
    %v72 = vmul.f32 %v56, %v68
    %v73 = vmul.f32 %v57, %v64
    %v74 = vmul.f32 %v58, %v68
    %v75 = vld [vmem:[#allocation5] sm:$0x3]
    %v77 = vlaneseq
    %v78 = vshrl.u32 %v77, 7
    %v79 = vsub.s32 0, %v78
    %v80 = vrot.slane %v75, %v79
    %v81 = vlaneseq
    %v82 = vshrl.u32 %v81, 7
    %v83 = vsub.s32 1, %v82
    %v84 = vrot.slane %v75, %v83
    %v87 = vadd.f32 %v71, %v80
    %v88 = vadd.f32 %v72, %v84
    %v89 = vadd.f32 %v73, %v80
    %v90 = vadd.f32 %v74, %v84
    %v91 = vmax.f32 %v87, 0.0
    %v92 = vmax.f32 %v88, 0.0
    %v93 = vmax.f32 %v89, 0.0
    %v94 = vmax.f32 %v90, 0.0
    %95 = vst [vmem:[#allocation2] sm:$0xff] 0
    %96 = vst [vmem:[#allocation2 + $0x8] sm:$0x33] 0
    %97 = vst [vmem:[#allocation2 + $0x10] sm:$0xff] 0
    %98 = vst [vmem:[#allocation2 + $0x18] sm:$0x33] 0
    %v99 = vpack.c.bf16 %v91, %v91
    %v100 = vpack.c.bf16 %v92, %v92
    %v103 = vunpack.c.l.b16 %v99
    %v104 = vunpack.c.l.b16 %v100
    %v105 = vpack.c.b16 %v104, %v103
    %v106 = vrot.slane %v105, 7
    %v107 = vrot.slane %v106, 4
    %110 = vst [vmem:[#allocation2] sm:$0xee] %v106
    %111 = vst [vmem:[#allocation2 + $0x8] sm:$0x11] %v107
    %v112 = vpack.c.bf16 %v93, %v93
    %v113 = vpack.c.bf16 %v94, %v94
    %v116 = vunpack.c.l.b16 %v112
    %v117 = vunpack.c.l.b16 %v113
    %v118 = vpack.c.b16 %v117, %v116
    %v119 = vrot.slane %v118, 7
    %v120 = vrot.slane %v119, 4
    %s123 = scalar_lea.vmem [#allocation2], 16
    %124 = vst [vmem:[%s123] sm:$0xee] %v119
    %125 = vst [vmem:[%s123 + $0x8] sm:$0x11] %v120
    %v126 = vld [vmem:[#allocation2] sm:$0xff]
    %v127 = vld [vmem:[#allocation2 + $0x8] sm:$0x11]
    %v128 = vld [vmem:[#allocation2] sm:$0xee]
    %v129 = vld [vmem:[#allocation2 + $0x8] sm:$0x33]
    %v130 = vld [vmem:[#allocation2] sm:$0xcc]
    %v132 = vunpack.c.l.b16 %v126
    %v133 = vunpack.c.h.b16 %v126
    %v134 = vpack.c.b16 %v132, %v132
    %v135 = vpack.c.b16 %v133, %v133
    %v137 = vunpack.c.l.b16 %v127
    %v138 = vunpack.c.h.b16 %v127
    %v139 = vpack.c.b16 %v137, %v132
    %v140 = vpack.c.b16 %v138, %v133
    %v142 = vshrl.u32 %v139, 16
    %v144 = vshll.u32 %v139, 16
    %v146 = vrot.slane %v144, 1
    %v147 = vor.u32 %v142, %v146
    %v149 = vshrl.u32 %v140, 16
    %v151 = vshll.u32 %v140, 16
    %v153 = vrot.slane %v151, 1
    %v154 = vor.u32 %v149, %v153
    %v156 = vunpack.c.l.b16 %v128
    %v157 = vunpack.c.h.b16 %v128
    %v158 = vpack.c.b16 %v137, %v156
    %v159 = vpack.c.b16 %v138, %v157
    %v160 = vrot.slane %v158, 1
    %v161 = vrot.slane %v159, 1
    %v163 = vunpack.c.l.b16 %v129
    %v164 = vunpack.c.h.b16 %v129
    %v165 = vpack.c.b16 %v163, %v156
    %v166 = vpack.c.b16 %v164, %v157
    %v168 = vshrl.u32 %v165, 16
    %v170 = vrot.slane %v168, 1
    %v171 = vshll.u32 %v165, 16
    %v173 = vrot.slane %v171, 2
    %v174 = vor.u32 %v170, %v173
    %v176 = vshrl.u32 %v166, 16
    %v178 = vrot.slane %v176, 1
    %v179 = vshll.u32 %v166, 16
    %v181 = vrot.slane %v179, 2
    %v182 = vor.u32 %v178, %v181
    %v184 = vunpack.c.l.b16 %v130
    %v185 = vunpack.c.h.b16 %v130
    %v186 = vpack.c.b16 %v163, %v184
    %v187 = vpack.c.b16 %v164, %v185
    %v188 = vrot.slane %v186, 2
    %v189 = vrot.slane %v187, 2
    %v190 = vld [vmem:[%s123] sm:$0xff]
    %v191 = vld [vmem:[%s123 + $0x8] sm:$0x11]
    %v192 = vld [vmem:[%s123] sm:$0xee]
    %v193 = vld [vmem:[%s123 + $0x8] sm:$0x33]
    %v194 = vld [vmem:[%s123] sm:$0xcc]
    %v196 = vunpack.c.l.b16 %v190
    %v197 = vunpack.c.h.b16 %v190
    %v198 = vpack.c.b16 %v196, %v196
    %v199 = vpack.c.b16 %v197, %v197
    %v201 = vunpack.c.l.b16 %v191
    %v202 = vunpack.c.h.b16 %v191
    %v203 = vpack.c.b16 %v201, %v196
    %v204 = vpack.c.b16 %v202, %v197
    %v206 = vshrl.u32 %v203, 16
    %v208 = vshll.u32 %v203, 16
    %v210 = vrot.slane %v208, 1
    %v211 = vor.u32 %v206, %v210
    %v213 = vshrl.u32 %v204, 16
    %v215 = vshll.u32 %v204, 16
    %v217 = vrot.slane %v215, 1
    %v218 = vor.u32 %v213, %v217
    %v220 = vunpack.c.l.b16 %v192
    %v221 = vunpack.c.h.b16 %v192
    %v222 = vpack.c.b16 %v201, %v220
    %v223 = vpack.c.b16 %v202, %v221
    %v224 = vrot.slane %v222, 1
    %v225 = vrot.slane %v223, 1
    %v227 = vunpack.c.l.b16 %v193
    %v228 = vunpack.c.h.b16 %v193
    %v229 = vpack.c.b16 %v227, %v220
    %v230 = vpack.c.b16 %v228, %v221
    %v232 = vshrl.u32 %v229, 16
    %v234 = vrot.slane %v232, 1
    %v235 = vshll.u32 %v229, 16
    %v237 = vrot.slane %v235, 2
    %v238 = vor.u32 %v234, %v237
    %v240 = vshrl.u32 %v230, 16
    %v242 = vrot.slane %v240, 1
    %v243 = vshll.u32 %v230, 16
    %v245 = vrot.slane %v243, 2
    %v246 = vor.u32 %v242, %v245
    %v248 = vunpack.c.l.b16 %v194
    %v249 = vunpack.c.h.b16 %v194
    %v250 = vpack.c.b16 %v227, %v248
    %v251 = vpack.c.b16 %v228, %v249
    %v252 = vrot.slane %v250, 2
    %v253 = vrot.slane %v251, 2
    %v254 = vrot.slane %v198, 4
    %v255 = vrot.slane %v199, 4
    %v256 = vrot.slane %v211, 4
    %v257 = vrot.slane %v218, 4
    %v258 = vrot.slane %v224, 4
    %v259 = vrot.slane %v225, 4
    %v260 = vrot.slane %v238, 4
    %v261 = vrot.slane %v246, 4
    %v262 = vrot.slane %v252, 4
    %v263 = vrot.slane %v253, 4
    %vm264 = vcmask 1043456
    %v267 = vsel %vm264, %v134, %v254
    %v271 = vsel %vm264, %v135, %v255
    %v275 = vsel %vm264, %v147, %v256
    %v279 = vsel %vm264, %v154, %v257
    %v283 = vsel %vm264, %v160, %v258
    %v287 = vsel %vm264, %v161, %v259
    %v291 = vsel %vm264, %v174, %v260
    %v295 = vsel %vm264, %v182, %v261
    %v299 = vsel %vm264, %v188, %v262
    %v303 = vsel %vm264, %v189, %v263
    %v305 = vld [vmem:[#allocation7] sm:$0xff]
    %v306 = vld [vmem:[#allocation7 + $0x8] sm:$0xff]
    %v307 = vld [vmem:[#allocation7 + $0x10] sm:$0xff]
    %v308 = vld [vmem:[#allocation7 + $0x18] sm:$0xff]
    %v309 = vld [vmem:[#allocation7 + $0x20] sm:$0xff]
    %v310 = vld [vmem:[#allocation7 + $0x28] sm:$0xff]
    %v311 = vld [vmem:[#allocation7 + $0x30] sm:$0xff]
    %v312 = vld [vmem:[#allocation7 + $0x38] sm:$0xff]
    %v313 = vld [vmem:[#allocation7 + $0x40] sm:$0xff]
    %v314 = vld [vmem:[#allocation7 + $0x48] sm:$0xff]
    %v315 = vld [vmem:[#allocation7 + $0x50] sm:$0xff]
    %v316 = vld [vmem:[#allocation7 + $0x58] sm:$0xff]
    %v317 = vld [vmem:[#allocation7 + $0x60] sm:$0xff]
    %v318 = vld [vmem:[#allocation7 + $0x68] sm:$0xff]
    %v319 = vld [vmem:[#allocation7 + $0x70] sm:$0xff]
    %v320 = vld [vmem:[#allocation7 + $0x78] sm:$0xff]
    %v321 = vld [vmem:[#allocation7 + $0x80] sm:$0xff]
    %v322 = vld [vmem:[#allocation7 + $0x88] sm:$0xff]
    %v323 = vld [vmem:[#allocation7 + $0x90] sm:$0xff]
    %v324 = vld [vmem:[#allocation7 + $0x98] sm:$0xff]
    %v325 = vld [vmem:[#allocation7 + $0xa0] sm:$0xff]
    %v326 = vld [vmem:[#allocation7 + $0xa8] sm:$0xff]
    %v327 = vld [vmem:[#allocation7 + $0xb0] sm:$0xff]
    %v328 = vld [vmem:[#allocation7 + $0xb8] sm:$0xff]
    %v329 = vld [vmem:[#allocation7 + $0xc0] sm:$0xff]
    %v330 = vld [vmem:[#allocation7 + $0xc8] sm:$0xff]
    %v331 = vld [vmem:[#allocation7 + $0xd0] sm:$0xff]
    %v332 = vld [vmem:[#allocation7 + $0xd8] sm:$0xff]
    %v333 = vld [vmem:[#allocation7 + $0xe0] sm:$0xff]
    %v334 = vld [vmem:[#allocation7 + $0xe8] sm:$0xff]
    %v335 = vld [vmem:[#allocation7 + $0xf0] sm:$0xff]
    %v336 = vld [vmem:[#allocation7 + $0xf8] sm:$0xff]
    %v337 = vld [vmem:[#allocation7 + $0x100] sm:$0xff]
    %v338 = vld [vmem:[#allocation7 + $0x108] sm:$0xff]
    %v339 = vld [vmem:[#allocation7 + $0x110] sm:$0xff]
    %v340 = vld [vmem:[#allocation7 + $0x118] sm:$0xff]
    %v341 = vld [vmem:[#allocation7 + $0x120] sm:$0xff]
    %v342 = vld [vmem:[#allocation7 + $0x128] sm:$0xff]
    %v343 = vld [vmem:[#allocation7 + $0x130] sm:$0xff]
    %v344 = vld [vmem:[#allocation7 + $0x138] sm:$0xff]
    %v345 = vld [vmem:[#allocation7 + $0x140] sm:$0xff]
    %v346 = vld [vmem:[#allocation7 + $0x148] sm:$0xff]
    %v347 = vld [vmem:[#allocation7 + $0x150] sm:$0xff]
    %v348 = vld [vmem:[#allocation7 + $0x158] sm:$0xff]
    %v349 = vld [vmem:[#allocation7 + $0x160] sm:$0xff]
    %v350 = vld [vmem:[#allocation7 + $0x168] sm:$0xff]
    %v351 = vld [vmem:[#allocation7 + $0x170] sm:$0xff]
    %v352 = vld [vmem:[#allocation7 + $0x178] sm:$0xff]
    %v353 = vld [vmem:[#allocation7 + $0x180] sm:$0xff]
    %v354 = vld [vmem:[#allocation7 + $0x188] sm:$0xff]
    %v355 = vld [vmem:[#allocation7 + $0x190] sm:$0xff]
    %v356 = vld [vmem:[#allocation7 + $0x198] sm:$0xff]
    %v357 = vld [vmem:[#allocation7 + $0x1a0] sm:$0xff]
    %v358 = vld [vmem:[#allocation7 + $0x1a8] sm:$0xff]
    %v359 = vld [vmem:[#allocation7 + $0x1b0] sm:$0xff]
    %v360 = vld [vmem:[#allocation7 + $0x1b8] sm:$0xff]
    %v361 = vld [vmem:[#allocation7 + $0x1c0] sm:$0xff]
    %v362 = vld [vmem:[#allocation7 + $0x1c8] sm:$0xff]
    %v363 = vld [vmem:[#allocation7 + $0x1d0] sm:$0xff]
    %v364 = vld [vmem:[#allocation7 + $0x1d8] sm:$0xff]
    %v365 = vld [vmem:[#allocation7 + $0x1e0] sm:$0xff]
    %v366 = vld [vmem:[#allocation7 + $0x1e8] sm:$0xff]
    %v367 = vld [vmem:[#allocation7 + $0x1f0] sm:$0xff]
    %v368 = vld [vmem:[#allocation7 + $0x1f8] sm:$0xff]
    %v369 = vld [vmem:[#allocation7 + $0x200] sm:$0xff]
    %v370 = vld [vmem:[#allocation7 + $0x208] sm:$0xff]
    %v371 = vld [vmem:[#allocation7 + $0x210] sm:$0xff]
    %v372 = vld [vmem:[#allocation7 + $0x218] sm:$0xff]
    %v373 = vld [vmem:[#allocation7 + $0x220] sm:$0xff]
    %v374 = vld [vmem:[#allocation7 + $0x228] sm:$0xff]
    %v375 = vld [vmem:[#allocation7 + $0x230] sm:$0xff]
    %v376 = vld [vmem:[#allocation7 + $0x238] sm:$0xff]
    %v377 = vld [vmem:[#allocation7 + $0x240] sm:$0xff]
    %v378 = vld [vmem:[#allocation7 + $0x248] sm:$0xff]
    %v379 = vld [vmem:[#allocation7 + $0x250] sm:$0xff]
    %v380 = vld [vmem:[#allocation7 + $0x258] sm:$0xff]
    %v381 = vld [vmem:[#allocation7 + $0x260] sm:$0xff]
    %v382 = vld [vmem:[#allocation7 + $0x268] sm:$0xff]
    %v383 = vld [vmem:[#allocation7 + $0x270] sm:$0xff]
    %v384 = vld [vmem:[#allocation7 + $0x278] sm:$0xff]
    %v385 = vld [vmem:[#allocation7 + $0x280] sm:$0xff]
    %v386 = vld [vmem:[#allocation7 + $0x288] sm:$0xff]
    %v387 = vld [vmem:[#allocation7 + $0x290] sm:$0xff]
    %v388 = vld [vmem:[#allocation7 + $0x298] sm:$0xff]
    %v389 = vld [vmem:[#allocation7 + $0x2a0] sm:$0xff]
    %v390 = vld [vmem:[#allocation7 + $0x2a8] sm:$0xff]
    %v391 = vld [vmem:[#allocation7 + $0x2b0] sm:$0xff]
    %v392 = vld [vmem:[#allocation7 + $0x2b8] sm:$0xff]
    %v393 = vld [vmem:[#allocation7 + $0x2c0] sm:$0xff]
    %v394 = vld [vmem:[#allocation7 + $0x2c8] sm:$0xff]
    %v395 = vld [vmem:[#allocation7 + $0x2d0] sm:$0xff]
    %v396 = vld [vmem:[#allocation7 + $0x2d8] sm:$0xff]
    %v397 = vld [vmem:[#allocation7 + $0x2e0] sm:$0xff]
    %v398 = vld [vmem:[#allocation7 + $0x2e8] sm:$0xff]
    %v399 = vld [vmem:[#allocation7 + $0x2f0] sm:$0xff]
    %v400 = vld [vmem:[#allocation7 + $0x2f8] sm:$0xff]
    %v401 = vld [vmem:[#allocation7 + $0x300] sm:$0xff]
    %v402 = vld [vmem:[#allocation7 + $0x308] sm:$0xff]
    %v403 = vld [vmem:[#allocation7 + $0x310] sm:$0xff]
    %v404 = vld [vmem:[#allocation7 + $0x318] sm:$0xff]
    %v405 = vld [vmem:[#allocation7 + $0x320] sm:$0xff]
    %v406 = vld [vmem:[#allocation7 + $0x328] sm:$0xff]
    %v407 = vld [vmem:[#allocation7 + $0x330] sm:$0xff]
    %v408 = vld [vmem:[#allocation7 + $0x338] sm:$0xff]
    %v409 = vld [vmem:[#allocation7 + $0x340] sm:$0xff]
    %v410 = vld [vmem:[#allocation7 + $0x348] sm:$0xff]
    %v411 = vld [vmem:[#allocation7 + $0x350] sm:$0xff]
    %v412 = vld [vmem:[#allocation7 + $0x358] sm:$0xff]
    %v413 = vld [vmem:[#allocation7 + $0x360] sm:$0xff]
    %v414 = vld [vmem:[#allocation7 + $0x368] sm:$0xff]
    %v415 = vld [vmem:[#allocation7 + $0x370] sm:$0xff]
    %v416 = vld [vmem:[#allocation7 + $0x378] sm:$0xff]
    %v417 = vld [vmem:[#allocation7 + $0x380] sm:$0xff]
    %v418 = vld [vmem:[#allocation7 + $0x388] sm:$0xff]
    %v419 = vld [vmem:[#allocation7 + $0x390] sm:$0xff]
    %v420 = vld [vmem:[#allocation7 + $0x398] sm:$0xff]
    %v421 = vld [vmem:[#allocation7 + $0x3a0] sm:$0xff]
    %v422 = vld [vmem:[#allocation7 + $0x3a8] sm:$0xff]
    %v423 = vld [vmem:[#allocation7 + $0x3b0] sm:$0xff]
    %v424 = vld [vmem:[#allocation7 + $0x3b8] sm:$0xff]
    %v425 = vld [vmem:[#allocation7 + $0x3c0] sm:$0xff]
    %v426 = vld [vmem:[#allocation7 + $0x3c8] sm:$0xff]
    %v427 = vld [vmem:[#allocation7 + $0x3d0] sm:$0xff]
    %v428 = vld [vmem:[#allocation7 + $0x3d8] sm:$0xff]
    %v429 = vld [vmem:[#allocation7 + $0x3e0] sm:$0xff]
    %v430 = vld [vmem:[#allocation7 + $0x3e8] sm:$0xff]
    %v431 = vld [vmem:[#allocation7 + $0x3f0] sm:$0xff]
    %v432 = vld [vmem:[#allocation7 + $0x3f8] sm:$0xff]
    %v433 = vld [vmem:[#allocation7 + $0x400] sm:$0xff]
    %v434 = vld [vmem:[#allocation7 + $0x408] sm:$0xff]
    %v435 = vld [vmem:[#allocation7 + $0x410] sm:$0xff]
    %v436 = vld [vmem:[#allocation7 + $0x418] sm:$0xff]
    %v437 = vld [vmem:[#allocation7 + $0x420] sm:$0xff]
    %v438 = vld [vmem:[#allocation7 + $0x428] sm:$0xff]
    %v439 = vld [vmem:[#allocation7 + $0x430] sm:$0xff]
    %v440 = vld [vmem:[#allocation7 + $0x438] sm:$0xff]
    %v441 = vld [vmem:[#allocation7 + $0x440] sm:$0xff]
    %v442 = vld [vmem:[#allocation7 + $0x448] sm:$0xff]
    %v443 = vld [vmem:[#allocation7 + $0x450] sm:$0xff]
    %v444 = vld [vmem:[#allocation7 + $0x458] sm:$0xff]
    %v445 = vld [vmem:[#allocation7 + $0x460] sm:$0xff]
    %v446 = vld [vmem:[#allocation7 + $0x468] sm:$0xff]
    %v447 = vld [vmem:[#allocation7 + $0x470] sm:$0xff]
    %v448 = vld [vmem:[#allocation7 + $0x478] sm:$0xff]
    %v449 = vld [vmem:[#allocation7 + $0x480] sm:$0xff]
    %v450 = vld [vmem:[#allocation7 + $0x488] sm:$0xff]
    %v451 = vld [vmem:[#allocation7 + $0x490] sm:$0xff]
    %v452 = vld [vmem:[#allocation7 + $0x498] sm:$0xff]
    %v453 = vld [vmem:[#allocation7 + $0x4a0] sm:$0xff]
    %v454 = vld [vmem:[#allocation7 + $0x4a8] sm:$0xff]
    %v455 = vld [vmem:[#allocation7 + $0x4b0] sm:$0xff]
    %v456 = vld [vmem:[#allocation7 + $0x4b8] sm:$0xff]
    %v457 = vld [vmem:[#allocation7 + $0x4c0] sm:$0xff]
    %v458 = vld [vmem:[#allocation7 + $0x4c8] sm:$0xff]
    %v459 = vld [vmem:[#allocation7 + $0x4d0] sm:$0xff]
    %v460 = vld [vmem:[#allocation7 + $0x4d8] sm:$0xff]
    %v461 = vld [vmem:[#allocation7 + $0x4e0] sm:$0xff]
    %v462 = vld [vmem:[#allocation7 + $0x4e8] sm:$0xff]
    %v463 = vld [vmem:[#allocation7 + $0x4f0] sm:$0xff]
    %v464 = vld [vmem:[#allocation7 + $0x4f8] sm:$0xff]
    %v465 = vld [vmem:[#allocation7 + $0x500] sm:$0xff]
    %v466 = vld [vmem:[#allocation7 + $0x508] sm:$0xff]
    %v467 = vld [vmem:[#allocation7 + $0x510] sm:$0xff]
    %v468 = vld [vmem:[#allocation7 + $0x518] sm:$0xff]
    %v469 = vld [vmem:[#allocation7 + $0x520] sm:$0xff]
    %v470 = vld [vmem:[#allocation7 + $0x528] sm:$0xff]
    %v471 = vld [vmem:[#allocation7 + $0x530] sm:$0xff]
    %v472 = vld [vmem:[#allocation7 + $0x538] sm:$0xff]
    %v473 = vld [vmem:[#allocation7 + $0x540] sm:$0xff]
    %v474 = vld [vmem:[#allocation7 + $0x548] sm:$0xff]
    %v475 = vld [vmem:[#allocation7 + $0x550] sm:$0xff]
    %v476 = vld [vmem:[#allocation7 + $0x558] sm:$0xff]
    %v477 = vld [vmem:[#allocation7 + $0x560] sm:$0xff]
    %v478 = vld [vmem:[#allocation7 + $0x568] sm:$0xff]
    %v479 = vld [vmem:[#allocation7 + $0x570] sm:$0xff]
    %v480 = vld [vmem:[#allocation7 + $0x578] sm:$0xff]
    %v481 = vld [vmem:[#allocation7 + $0x580] sm:$0xff]
    %v482 = vld [vmem:[#allocation7 + $0x588] sm:$0xff]
    %v483 = vld [vmem:[#allocation7 + $0x590] sm:$0xff]
    %v484 = vld [vmem:[#allocation7 + $0x598] sm:$0xff]
    %v485 = vld [vmem:[#allocation7 + $0x5a0] sm:$0xff]
    %v486 = vld [vmem:[#allocation7 + $0x5a8] sm:$0xff]
    %v487 = vld [vmem:[#allocation7 + $0x5b0] sm:$0xff]
    %v488 = vld [vmem:[#allocation7 + $0x5b8] sm:$0xff]
    %v489 = vld [vmem:[#allocation7 + $0x5c0] sm:$0xff]
    %v490 = vld [vmem:[#allocation7 + $0x5c8] sm:$0xff]
    %v491 = vld [vmem:[#allocation7 + $0x5d0] sm:$0xff]
    %v492 = vld [vmem:[#allocation7 + $0x5d8] sm:$0xff]
    %v493 = vld [vmem:[#allocation7 + $0x5e0] sm:$0xff]
    %v494 = vld [vmem:[#allocation7 + $0x5e8] sm:$0xff]
    %v495 = vld [vmem:[#allocation7 + $0x5f0] sm:$0xff]
    %v496 = vld [vmem:[#allocation7 + $0x5f8] sm:$0xff]
    %v497 = vld [vmem:[#allocation7 + $0x600] sm:$0xff]
    %v498 = vld [vmem:[#allocation7 + $0x608] sm:$0xff]
    %v499 = vld [vmem:[#allocation7 + $0x610] sm:$0xff]
    %v500 = vld [vmem:[#allocation7 + $0x618] sm:$0xff]
    %v501 = vld [vmem:[#allocation7 + $0x620] sm:$0xff]
    %v502 = vld [vmem:[#allocation7 + $0x628] sm:$0xff]
    %v503 = vld [vmem:[#allocation7 + $0x630] sm:$0xff]
    %v504 = vld [vmem:[#allocation7 + $0x638] sm:$0xff]
    %v505 = vld [vmem:[#allocation7 + $0x640] sm:$0xff]
    %v506 = vld [vmem:[#allocation7 + $0x648] sm:$0xff]
    %v507 = vld [vmem:[#allocation7 + $0x650] sm:$0xff]
    %v508 = vld [vmem:[#allocation7 + $0x658] sm:$0xff]
    %v509 = vld [vmem:[#allocation7 + $0x660] sm:$0xff]
    %v510 = vld [vmem:[#allocation7 + $0x668] sm:$0xff]
    %v511 = vld [vmem:[#allocation7 + $0x670] sm:$0xff]
    %v512 = vld [vmem:[#allocation7 + $0x678] sm:$0xff]
    %v513 = vld [vmem:[#allocation7 + $0x680] sm:$0xff]
    %v514 = vld [vmem:[#allocation7 + $0x688] sm:$0xff]
    %v515 = vld [vmem:[#allocation7 + $0x690] sm:$0xff]
    %v516 = vld [vmem:[#allocation7 + $0x698] sm:$0xff]
    %v517 = vld [vmem:[#allocation7 + $0x6a0] sm:$0xff]
    %v518 = vld [vmem:[#allocation7 + $0x6a8] sm:$0xff]
    %v519 = vld [vmem:[#allocation7 + $0x6b0] sm:$0xff]
    %v520 = vld [vmem:[#allocation7 + $0x6b8] sm:$0xff]
    %v521 = vld [vmem:[#allocation7 + $0x6c0] sm:$0xff]
    %v522 = vld [vmem:[#allocation7 + $0x6c8] sm:$0xff]
    %v523 = vld [vmem:[#allocation7 + $0x6d0] sm:$0xff]
    %v524 = vld [vmem:[#allocation7 + $0x6d8] sm:$0xff]
    %v525 = vld [vmem:[#allocation7 + $0x6e0] sm:$0xff]
    %v526 = vld [vmem:[#allocation7 + $0x6e8] sm:$0xff]
    %v527 = vld [vmem:[#allocation7 + $0x6f0] sm:$0xff]
    %v528 = vld [vmem:[#allocation7 + $0x6f8] sm:$0xff]
    %v529 = vld [vmem:[#allocation7 + $0x700] sm:$0xff]
    %v530 = vld [vmem:[#allocation7 + $0x708] sm:$0xff]
    %v531 = vld [vmem:[#allocation7 + $0x710] sm:$0xff]
    %v532 = vld [vmem:[#allocation7 + $0x718] sm:$0xff]
    %v533 = vld [vmem:[#allocation7 + $0x720] sm:$0xff]
    %v534 = vld [vmem:[#allocation7 + $0x728] sm:$0xff]
    %v535 = vld [vmem:[#allocation7 + $0x730] sm:$0xff]
    %v536 = vld [vmem:[#allocation7 + $0x738] sm:$0xff]
    %v537 = vld [vmem:[#allocation7 + $0x740] sm:$0xff]
    %v538 = vld [vmem:[#allocation7 + $0x748] sm:$0xff]
    %v539 = vld [vmem:[#allocation7 + $0x750] sm:$0xff]
    %v540 = vld [vmem:[#allocation7 + $0x758] sm:$0xff]
    %v541 = vld [vmem:[#allocation7 + $0x760] sm:$0xff]
    %v542 = vld [vmem:[#allocation7 + $0x768] sm:$0xff]
    %v543 = vld [vmem:[#allocation7 + $0x770] sm:$0xff]
    %v544 = vld [vmem:[#allocation7 + $0x778] sm:$0xff]
    %v545 = vld [vmem:[#allocation7 + $0x780] sm:$0xff]
    %v546 = vld [vmem:[#allocation7 + $0x788] sm:$0xff]
    %v547 = vld [vmem:[#allocation7 + $0x790] sm:$0xff]
    %v548 = vld [vmem:[#allocation7 + $0x798] sm:$0xff]
    %v549 = vld [vmem:[#allocation7 + $0x7a0] sm:$0xff]
    %v550 = vld [vmem:[#allocation7 + $0x7a8] sm:$0xff]
    %v551 = vld [vmem:[#allocation7 + $0x7b0] sm:$0xff]
    %v552 = vld [vmem:[#allocation7 + $0x7b8] sm:$0xff]
    %v553 = vld [vmem:[#allocation7 + $0x7c0] sm:$0xff]
    %v554 = vld [vmem:[#allocation7 + $0x7c8] sm:$0xff]
    %v555 = vld [vmem:[#allocation7 + $0x7d0] sm:$0xff]
    %v556 = vld [vmem:[#allocation7 + $0x7d8] sm:$0xff]
    %v557 = vld [vmem:[#allocation7 + $0x7e0] sm:$0xff]
    %v558 = vld [vmem:[#allocation7 + $0x7e8] sm:$0xff]
    %v559 = vld [vmem:[#allocation7 + $0x7f0] sm:$0xff]
    %v560 = vld [vmem:[#allocation7 + $0x7f8] sm:$0xff]
    %v561 = vld [vmem:[#allocation7 + $0x800] sm:$0xff]
    %v562 = vld [vmem:[#allocation7 + $0x808] sm:$0xff]
    %v563 = vld [vmem:[#allocation7 + $0x810] sm:$0xff]
    %v564 = vld [vmem:[#allocation7 + $0x818] sm:$0xff]
    %v565 = vld [vmem:[#allocation7 + $0x820] sm:$0xff]
    %v566 = vld [vmem:[#allocation7 + $0x828] sm:$0xff]
    %v567 = vld [vmem:[#allocation7 + $0x830] sm:$0xff]
    %v568 = vld [vmem:[#allocation7 + $0x838] sm:$0xff]
    %v569 = vld [vmem:[#allocation7 + $0x840] sm:$0xff]
    %v570 = vld [vmem:[#allocation7 + $0x848] sm:$0xff]
    %v571 = vld [vmem:[#allocation7 + $0x850] sm:$0xff]
    %v572 = vld [vmem:[#allocation7 + $0x858] sm:$0xff]
    %v573 = vld [vmem:[#allocation7 + $0x860] sm:$0xff]
    %v574 = vld [vmem:[#allocation7 + $0x868] sm:$0xff]
    %v575 = vld [vmem:[#allocation7 + $0x870] sm:$0xff]
    %v576 = vld [vmem:[#allocation7 + $0x878] sm:$0xff]
    %v577 = vld [vmem:[#allocation7 + $0x880] sm:$0xff]
    %v578 = vld [vmem:[#allocation7 + $0x888] sm:$0xff]
    %v579 = vld [vmem:[#allocation7 + $0x890] sm:$0xff]
    %v580 = vld [vmem:[#allocation7 + $0x898] sm:$0xff]
    %v581 = vld [vmem:[#allocation7 + $0x8a0] sm:$0xff]
    %v582 = vld [vmem:[#allocation7 + $0x8a8] sm:$0xff]
    %v583 = vld [vmem:[#allocation7 + $0x8b0] sm:$0xff]
    %v584 = vld [vmem:[#allocation7 + $0x8b8] sm:$0xff]
    %v585 = vld [vmem:[#allocation7 + $0x8c0] sm:$0xff]
    %v586 = vld [vmem:[#allocation7 + $0x8c8] sm:$0xff]
    %v587 = vld [vmem:[#allocation7 + $0x8d0] sm:$0xff]
    %v588 = vld [vmem:[#allocation7 + $0x8d8] sm:$0xff]
    %v589 = vld [vmem:[#allocation7 + $0x8e0] sm:$0xff]
    %v590 = vld [vmem:[#allocation7 + $0x8e8] sm:$0xff]
    %v591 = vld [vmem:[#allocation7 + $0x8f0] sm:$0xff]
    %v592 = vld [vmem:[#allocation7 + $0x8f8] sm:$0xff]
    %v593 = vld [vmem:[#allocation7 + $0x900] sm:$0xff]
    %v594 = vld [vmem:[#allocation7 + $0x908] sm:$0xff]
    %v595 = vld [vmem:[#allocation7 + $0x910] sm:$0xff]
    %v596 = vld [vmem:[#allocation7 + $0x918] sm:$0xff]
    %v597 = vld [vmem:[#allocation7 + $0x920] sm:$0xff]
    %v598 = vld [vmem:[#allocation7 + $0x928] sm:$0xff]
    %v599 = vld [vmem:[#allocation7 + $0x930] sm:$0xff]
    %v600 = vld [vmem:[#allocation7 + $0x938] sm:$0xff]
    %v601 = vld [vmem:[#allocation7 + $0x940] sm:$0xff]
    %v602 = vld [vmem:[#allocation7 + $0x948] sm:$0xff]
    %v603 = vld [vmem:[#allocation7 + $0x950] sm:$0xff]
    %v604 = vld [vmem:[#allocation7 + $0x958] sm:$0xff]
    %v605 = vld [vmem:[#allocation7 + $0x960] sm:$0xff]
    %v606 = vld [vmem:[#allocation7 + $0x968] sm:$0xff]
    %v607 = vld [vmem:[#allocation7 + $0x970] sm:$0xff]
    %v608 = vld [vmem:[#allocation7 + $0x978] sm:$0xff]
    %v609 = vld [vmem:[#allocation7 + $0x980] sm:$0xff]
    %v610 = vld [vmem:[#allocation7 + $0x988] sm:$0xff]
    %v611 = vld [vmem:[#allocation7 + $0x990] sm:$0xff]
    %v612 = vld [vmem:[#allocation7 + $0x998] sm:$0xff]
    %v613 = vld [vmem:[#allocation7 + $0x9a0] sm:$0xff]
    %v614 = vld [vmem:[#allocation7 + $0x9a8] sm:$0xff]
    %v615 = vld [vmem:[#allocation7 + $0x9b0] sm:$0xff]
    %v616 = vld [vmem:[#allocation7 + $0x9b8] sm:$0xff]
    %v617 = vld [vmem:[#allocation7 + $0x9c0] sm:$0xff]
    %v618 = vld [vmem:[#allocation7 + $0x9c8] sm:$0xff]
    %v619 = vld [vmem:[#allocation7 + $0x9d0] sm:$0xff]
    %v620 = vld [vmem:[#allocation7 + $0x9d8] sm:$0xff]
    %v621 = vld [vmem:[#allocation7 + $0x9e0] sm:$0xff]
    %v622 = vld [vmem:[#allocation7 + $0x9e8] sm:$0xff]
    %v623 = vld [vmem:[#allocation7 + $0x9f0] sm:$0xff]
    %v624 = vld [vmem:[#allocation7 + $0x9f8] sm:$0xff]
    %v945 = vunpack.c.l.b16 %v305
    %v946 = vunpack.c.h.b16 %v305
    %v947 = vunpack.c.l.b16 %v306
    %v948 = vunpack.c.h.b16 %v306
    %v949 = vunpack.c.l.b16 %v307
    %v950 = vunpack.c.h.b16 %v307
    %v951 = vunpack.c.l.b16 %v308
    %v952 = vunpack.c.h.b16 %v308
    %v953 = vunpack.c.l.b16 %v309
    %v954 = vunpack.c.h.b16 %v309
    %v955 = vunpack.c.l.b16 %v310
    %v956 = vunpack.c.h.b16 %v310
    %v957 = vunpack.c.l.b16 %v311
    %v958 = vunpack.c.h.b16 %v311
    %v959 = vunpack.c.l.b16 %v312
    %v960 = vunpack.c.h.b16 %v312
    %v961 = vunpack.c.l.b16 %v313
    %v962 = vunpack.c.h.b16 %v313
    %v963 = vunpack.c.l.b16 %v314
    %v964 = vunpack.c.h.b16 %v314
    %v965 = vunpack.c.l.b16 %v315
    %v966 = vunpack.c.h.b16 %v315
    %v967 = vunpack.c.l.b16 %v316
    %v968 = vunpack.c.h.b16 %v316
    %v969 = vunpack.c.l.b16 %v317
    %v970 = vunpack.c.h.b16 %v317
    %v971 = vunpack.c.l.b16 %v318
    %v972 = vunpack.c.h.b16 %v318
    %v973 = vunpack.c.l.b16 %v319
    %v974 = vunpack.c.h.b16 %v319
    %v975 = vunpack.c.l.b16 %v320
    %v976 = vunpack.c.h.b16 %v320
    %v977 = vunpack.c.l.b16 %v321
    %v978 = vunpack.c.h.b16 %v321
    %v979 = vunpack.c.l.b16 %v322
    %v980 = vunpack.c.h.b16 %v322
    %v981 = vunpack.c.l.b16 %v323
    %v982 = vunpack.c.h.b16 %v323
    %v983 = vunpack.c.l.b16 %v324
    %v984 = vunpack.c.h.b16 %v324
    %v985 = vunpack.c.l.b16 %v325
    %v986 = vunpack.c.h.b16 %v325
    %v987 = vunpack.c.l.b16 %v326
    %v988 = vunpack.c.h.b16 %v326
    %v989 = vunpack.c.l.b16 %v327
    %v990 = vunpack.c.h.b16 %v327
    %v991 = vunpack.c.l.b16 %v328
    %v992 = vunpack.c.h.b16 %v328
    %v993 = vunpack.c.l.b16 %v329
    %v994 = vunpack.c.h.b16 %v329
    %v995 = vunpack.c.l.b16 %v330
    %v996 = vunpack.c.h.b16 %v330
    %v997 = vunpack.c.l.b16 %v331
    %v998 = vunpack.c.h.b16 %v331
    %v999 = vunpack.c.l.b16 %v332
    %v1000 = vunpack.c.h.b16 %v332
    %v1001 = vunpack.c.l.b16 %v333
    %v1002 = vunpack.c.h.b16 %v333
    %v1003 = vunpack.c.l.b16 %v334
    %v1004 = vunpack.c.h.b16 %v334
    %v1005 = vunpack.c.l.b16 %v335
    %v1006 = vunpack.c.h.b16 %v335
    %v1007 = vunpack.c.l.b16 %v336
    %v1008 = vunpack.c.h.b16 %v336
    %v1009 = vunpack.c.l.b16 %v337
    %v1010 = vunpack.c.h.b16 %v337
    %v1011 = vunpack.c.l.b16 %v338
    %v1012 = vunpack.c.h.b16 %v338
    %v1013 = vunpack.c.l.b16 %v339
    %v1014 = vunpack.c.h.b16 %v339
    %v1015 = vunpack.c.l.b16 %v340
    %v1016 = vunpack.c.h.b16 %v340
    %v1017 = vunpack.c.l.b16 %v341
    %v1018 = vunpack.c.h.b16 %v341
    %v1019 = vunpack.c.l.b16 %v342
    %v1020 = vunpack.c.h.b16 %v342
    %v1021 = vunpack.c.l.b16 %v343
    %v1022 = vunpack.c.h.b16 %v343
    %v1023 = vunpack.c.l.b16 %v344
    %v1024 = vunpack.c.h.b16 %v344
    %v1025 = vunpack.c.l.b16 %v345
    %v1026 = vunpack.c.h.b16 %v345
    %v1027 = vunpack.c.l.b16 %v346
    %v1028 = vunpack.c.h.b16 %v346
    %v1029 = vunpack.c.l.b16 %v347
    %v1030 = vunpack.c.h.b16 %v347
    %v1031 = vunpack.c.l.b16 %v348
    %v1032 = vunpack.c.h.b16 %v348
    %v1033 = vunpack.c.l.b16 %v349
    %v1034 = vunpack.c.h.b16 %v349
    %v1035 = vunpack.c.l.b16 %v350
    %v1036 = vunpack.c.h.b16 %v350
    %v1037 = vunpack.c.l.b16 %v351
    %v1038 = vunpack.c.h.b16 %v351
    %v1039 = vunpack.c.l.b16 %v352
    %v1040 = vunpack.c.h.b16 %v352
    %v1041 = vunpack.c.l.b16 %v353
    %v1042 = vunpack.c.h.b16 %v353
    %v1043 = vunpack.c.l.b16 %v354
    %v1044 = vunpack.c.h.b16 %v354
    %v1045 = vunpack.c.l.b16 %v355
    %v1046 = vunpack.c.h.b16 %v355
    %v1047 = vunpack.c.l.b16 %v356
    %v1048 = vunpack.c.h.b16 %v356
    %v1049 = vunpack.c.l.b16 %v357
    %v1050 = vunpack.c.h.b16 %v357
    %v1051 = vunpack.c.l.b16 %v358
    %v1052 = vunpack.c.h.b16 %v358
    %v1053 = vunpack.c.l.b16 %v359
    %v1054 = vunpack.c.h.b16 %v359
    %v1055 = vunpack.c.l.b16 %v360
    %v1056 = vunpack.c.h.b16 %v360
    %v1057 = vunpack.c.l.b16 %v361
    %v1058 = vunpack.c.h.b16 %v361
    %v1059 = vunpack.c.l.b16 %v362
    %v1060 = vunpack.c.h.b16 %v362
    %v1061 = vunpack.c.l.b16 %v363
    %v1062 = vunpack.c.h.b16 %v363
    %v1063 = vunpack.c.l.b16 %v364
    %v1064 = vunpack.c.h.b16 %v364
    %v1065 = vunpack.c.l.b16 %v365
    %v1066 = vunpack.c.h.b16 %v365
    %v1067 = vunpack.c.l.b16 %v366
    %v1068 = vunpack.c.h.b16 %v366
    %v1069 = vunpack.c.l.b16 %v367
    %v1070 = vunpack.c.h.b16 %v367
    %v1071 = vunpack.c.l.b16 %v368
    %v1072 = vunpack.c.h.b16 %v368
    %v1073 = vunpack.c.l.b16 %v369
    %v1074 = vunpack.c.h.b16 %v369
    %v1075 = vunpack.c.l.b16 %v370
    %v1076 = vunpack.c.h.b16 %v370
    %v1077 = vunpack.c.l.b16 %v371
    %v1078 = vunpack.c.h.b16 %v371
    %v1079 = vunpack.c.l.b16 %v372
    %v1080 = vunpack.c.h.b16 %v372
    %v1081 = vunpack.c.l.b16 %v373
    %v1082 = vunpack.c.h.b16 %v373
    %v1083 = vunpack.c.l.b16 %v374
    %v1084 = vunpack.c.h.b16 %v374
    %v1085 = vunpack.c.l.b16 %v375
    %v1086 = vunpack.c.h.b16 %v375
    %v1087 = vunpack.c.l.b16 %v376
    %v1088 = vunpack.c.h.b16 %v376
    %v1089 = vunpack.c.l.b16 %v377
    %v1090 = vunpack.c.h.b16 %v377
    %v1091 = vunpack.c.l.b16 %v378
    %v1092 = vunpack.c.h.b16 %v378
    %v1093 = vunpack.c.l.b16 %v379
    %v1094 = vunpack.c.h.b16 %v379
    %v1095 = vunpack.c.l.b16 %v380
    %v1096 = vunpack.c.h.b16 %v380
    %v1097 = vunpack.c.l.b16 %v381
    %v1098 = vunpack.c.h.b16 %v381
    %v1099 = vunpack.c.l.b16 %v382
    %v1100 = vunpack.c.h.b16 %v382
    %v1101 = vunpack.c.l.b16 %v383
    %v1102 = vunpack.c.h.b16 %v383
    %v1103 = vunpack.c.l.b16 %v384
    %v1104 = vunpack.c.h.b16 %v384
    %v1105 = vunpack.c.l.b16 %v385
    %v1106 = vunpack.c.h.b16 %v385
    %v1107 = vunpack.c.l.b16 %v386
    %v1108 = vunpack.c.h.b16 %v386
    %v1109 = vunpack.c.l.b16 %v387
    %v1110 = vunpack.c.h.b16 %v387
    %v1111 = vunpack.c.l.b16 %v388
    %v1112 = vunpack.c.h.b16 %v388
    %v1113 = vunpack.c.l.b16 %v389
    %v1114 = vunpack.c.h.b16 %v389
    %v1115 = vunpack.c.l.b16 %v390
    %v1116 = vunpack.c.h.b16 %v390
    %v1117 = vunpack.c.l.b16 %v391
    %v1118 = vunpack.c.h.b16 %v391
    %v1119 = vunpack.c.l.b16 %v392
    %v1120 = vunpack.c.h.b16 %v392
    %v1121 = vunpack.c.l.b16 %v393
    %v1122 = vunpack.c.h.b16 %v393
    %v1123 = vunpack.c.l.b16 %v394
    %v1124 = vunpack.c.h.b16 %v394
    %v1125 = vunpack.c.l.b16 %v395
    %v1126 = vunpack.c.h.b16 %v395
    %v1127 = vunpack.c.l.b16 %v396
    %v1128 = vunpack.c.h.b16 %v396
    %v1129 = vunpack.c.l.b16 %v397
    %v1130 = vunpack.c.h.b16 %v397
    %v1131 = vunpack.c.l.b16 %v398
    %v1132 = vunpack.c.h.b16 %v398
    %v1133 = vunpack.c.l.b16 %v399
    %v1134 = vunpack.c.h.b16 %v399
    %v1135 = vunpack.c.l.b16 %v400
    %v1136 = vunpack.c.h.b16 %v400
    %v1137 = vunpack.c.l.b16 %v401
    %v1138 = vunpack.c.h.b16 %v401
    %v1139 = vunpack.c.l.b16 %v402
    %v1140 = vunpack.c.h.b16 %v402
    %v1141 = vunpack.c.l.b16 %v403
    %v1142 = vunpack.c.h.b16 %v403
    %v1143 = vunpack.c.l.b16 %v404
    %v1144 = vunpack.c.h.b16 %v404
    %v1145 = vunpack.c.l.b16 %v405
    %v1146 = vunpack.c.h.b16 %v405
    %v1147 = vunpack.c.l.b16 %v406
    %v1148 = vunpack.c.h.b16 %v406
    %v1149 = vunpack.c.l.b16 %v407
    %v1150 = vunpack.c.h.b16 %v407
    %v1151 = vunpack.c.l.b16 %v408
    %v1152 = vunpack.c.h.b16 %v408
    %v1153 = vunpack.c.l.b16 %v409
    %v1154 = vunpack.c.h.b16 %v409
    %v1155 = vunpack.c.l.b16 %v410
    %v1156 = vunpack.c.h.b16 %v410
    %v1157 = vunpack.c.l.b16 %v411
    %v1158 = vunpack.c.h.b16 %v411
    %v1159 = vunpack.c.l.b16 %v412
    %v1160 = vunpack.c.h.b16 %v412
    %v1161 = vunpack.c.l.b16 %v413
    %v1162 = vunpack.c.h.b16 %v413
    %v1163 = vunpack.c.l.b16 %v414
    %v1164 = vunpack.c.h.b16 %v414
    %v1165 = vunpack.c.l.b16 %v415
    %v1166 = vunpack.c.h.b16 %v415
    %v1167 = vunpack.c.l.b16 %v416
    %v1168 = vunpack.c.h.b16 %v416
    %v1169 = vunpack.c.l.b16 %v417
    %v1170 = vunpack.c.h.b16 %v417
    %v1171 = vunpack.c.l.b16 %v418
    %v1172 = vunpack.c.h.b16 %v418
    %v1173 = vunpack.c.l.b16 %v419
    %v1174 = vunpack.c.h.b16 %v419
    %v1175 = vunpack.c.l.b16 %v420
    %v1176 = vunpack.c.h.b16 %v420
    %v1177 = vunpack.c.l.b16 %v421
    %v1178 = vunpack.c.h.b16 %v421
    %v1179 = vunpack.c.l.b16 %v422
    %v1180 = vunpack.c.h.b16 %v422
    %v1181 = vunpack.c.l.b16 %v423
    %v1182 = vunpack.c.h.b16 %v423
    %v1183 = vunpack.c.l.b16 %v424
    %v1184 = vunpack.c.h.b16 %v424
    %v1185 = vunpack.c.l.b16 %v425
    %v1186 = vunpack.c.h.b16 %v425
    %v1187 = vunpack.c.l.b16 %v426
    %v1188 = vunpack.c.h.b16 %v426
    %v1189 = vunpack.c.l.b16 %v427
    %v1190 = vunpack.c.h.b16 %v427
    %v1191 = vunpack.c.l.b16 %v428
    %v1192 = vunpack.c.h.b16 %v428
    %v1193 = vunpack.c.l.b16 %v429
    %v1194 = vunpack.c.h.b16 %v429
    %v1195 = vunpack.c.l.b16 %v430
    %v1196 = vunpack.c.h.b16 %v430
    %v1197 = vunpack.c.l.b16 %v431
    %v1198 = vunpack.c.h.b16 %v431
    %v1199 = vunpack.c.l.b16 %v432
    %v1200 = vunpack.c.h.b16 %v432
    %v1201 = vunpack.c.l.b16 %v433
    %v1202 = vunpack.c.h.b16 %v433
    %v1203 = vunpack.c.l.b16 %v434
    %v1204 = vunpack.c.h.b16 %v434
    %v1205 = vunpack.c.l.b16 %v435
    %v1206 = vunpack.c.h.b16 %v435
    %v1207 = vunpack.c.l.b16 %v436
    %v1208 = vunpack.c.h.b16 %v436
    %v1209 = vunpack.c.l.b16 %v437
    %v1210 = vunpack.c.h.b16 %v437
    %v1211 = vunpack.c.l.b16 %v438
    %v1212 = vunpack.c.h.b16 %v438
    %v1213 = vunpack.c.l.b16 %v439
    %v1214 = vunpack.c.h.b16 %v439
    %v1215 = vunpack.c.l.b16 %v440
    %v1216 = vunpack.c.h.b16 %v440
    %v1217 = vunpack.c.l.b16 %v441
    %v1218 = vunpack.c.h.b16 %v441
    %v1219 = vunpack.c.l.b16 %v442
    %v1220 = vunpack.c.h.b16 %v442
    %v1221 = vunpack.c.l.b16 %v443
    %v1222 = vunpack.c.h.b16 %v443
    %v1223 = vunpack.c.l.b16 %v444
    %v1224 = vunpack.c.h.b16 %v444
    %v1225 = vunpack.c.l.b16 %v445
    %v1226 = vunpack.c.h.b16 %v445
    %v1227 = vunpack.c.l.b16 %v446
    %v1228 = vunpack.c.h.b16 %v446
    %v1229 = vunpack.c.l.b16 %v447
    %v1230 = vunpack.c.h.b16 %v447
    %v1231 = vunpack.c.l.b16 %v448
    %v1232 = vunpack.c.h.b16 %v448
    %v1233 = vunpack.c.l.b16 %v449
    %v1234 = vunpack.c.h.b16 %v449
    %v1235 = vunpack.c.l.b16 %v450
    %v1236 = vunpack.c.h.b16 %v450
    %v1237 = vunpack.c.l.b16 %v451
    %v1238 = vunpack.c.h.b16 %v451
    %v1239 = vunpack.c.l.b16 %v452
    %v1240 = vunpack.c.h.b16 %v452
    %v1241 = vunpack.c.l.b16 %v453
    %v1242 = vunpack.c.h.b16 %v453
    %v1243 = vunpack.c.l.b16 %v454
    %v1244 = vunpack.c.h.b16 %v454
    %v1245 = vunpack.c.l.b16 %v455
    %v1246 = vunpack.c.h.b16 %v455
    %v1247 = vunpack.c.l.b16 %v456
    %v1248 = vunpack.c.h.b16 %v456
    %v1249 = vunpack.c.l.b16 %v457
    %v1250 = vunpack.c.h.b16 %v457
    %v1251 = vunpack.c.l.b16 %v458
    %v1252 = vunpack.c.h.b16 %v458
    %v1253 = vunpack.c.l.b16 %v459
    %v1254 = vunpack.c.h.b16 %v459
    %v1255 = vunpack.c.l.b16 %v460
    %v1256 = vunpack.c.h.b16 %v460
    %v1257 = vunpack.c.l.b16 %v461
    %v1258 = vunpack.c.h.b16 %v461
    %v1259 = vunpack.c.l.b16 %v462
    %v1260 = vunpack.c.h.b16 %v462
    %v1261 = vunpack.c.l.b16 %v463
    %v1262 = vunpack.c.h.b16 %v463
    %v1263 = vunpack.c.l.b16 %v464
    %v1264 = vunpack.c.h.b16 %v464
    %v1265 = vunpack.c.l.b16 %v465
    %v1266 = vunpack.c.h.b16 %v465
    %v1267 = vunpack.c.l.b16 %v466
    %v1268 = vunpack.c.h.b16 %v466
    %v1269 = vunpack.c.l.b16 %v467
    %v1270 = vunpack.c.h.b16 %v467
    %v1271 = vunpack.c.l.b16 %v468
    %v1272 = vunpack.c.h.b16 %v468
    %v1273 = vunpack.c.l.b16 %v469
    %v1274 = vunpack.c.h.b16 %v469
    %v1275 = vunpack.c.l.b16 %v470
    %v1276 = vunpack.c.h.b16 %v470
    %v1277 = vunpack.c.l.b16 %v471
    %v1278 = vunpack.c.h.b16 %v471
    %v1279 = vunpack.c.l.b16 %v472
    %v1280 = vunpack.c.h.b16 %v472
    %v1281 = vunpack.c.l.b16 %v473
    %v1282 = vunpack.c.h.b16 %v473
    %v1283 = vunpack.c.l.b16 %v474
    %v1284 = vunpack.c.h.b16 %v474
    %v1285 = vunpack.c.l.b16 %v475
    %v1286 = vunpack.c.h.b16 %v475
    %v1287 = vunpack.c.l.b16 %v476
    %v1288 = vunpack.c.h.b16 %v476
    %v1289 = vunpack.c.l.b16 %v477
    %v1290 = vunpack.c.h.b16 %v477
    %v1291 = vunpack.c.l.b16 %v478
    %v1292 = vunpack.c.h.b16 %v478
    %v1293 = vunpack.c.l.b16 %v479
    %v1294 = vunpack.c.h.b16 %v479
    %v1295 = vunpack.c.l.b16 %v480
    %v1296 = vunpack.c.h.b16 %v480
    %v1297 = vunpack.c.l.b16 %v481
    %v1298 = vunpack.c.h.b16 %v481
    %v1299 = vunpack.c.l.b16 %v482
    %v1300 = vunpack.c.h.b16 %v482
    %v1301 = vunpack.c.l.b16 %v483
    %v1302 = vunpack.c.h.b16 %v483
    %v1303 = vunpack.c.l.b16 %v484
    %v1304 = vunpack.c.h.b16 %v484
    %v1305 = vunpack.c.l.b16 %v485
    %v1306 = vunpack.c.h.b16 %v485
    %v1307 = vunpack.c.l.b16 %v486
    %v1308 = vunpack.c.h.b16 %v486
    %v1309 = vunpack.c.l.b16 %v487
    %v1310 = vunpack.c.h.b16 %v487
    %v1311 = vunpack.c.l.b16 %v488
    %v1312 = vunpack.c.h.b16 %v488
    %v1313 = vunpack.c.l.b16 %v489
    %v1314 = vunpack.c.h.b16 %v489
    %v1315 = vunpack.c.l.b16 %v490
    %v1316 = vunpack.c.h.b16 %v490
    %v1317 = vunpack.c.l.b16 %v491
    %v1318 = vunpack.c.h.b16 %v491
    %v1319 = vunpack.c.l.b16 %v492
    %v1320 = vunpack.c.h.b16 %v492
    %v1321 = vunpack.c.l.b16 %v493
    %v1322 = vunpack.c.h.b16 %v493
    %v1323 = vunpack.c.l.b16 %v494
    %v1324 = vunpack.c.h.b16 %v494
    %v1325 = vunpack.c.l.b16 %v495
    %v1326 = vunpack.c.h.b16 %v495
    %v1327 = vunpack.c.l.b16 %v496
    %v1328 = vunpack.c.h.b16 %v496
    %v1329 = vunpack.c.l.b16 %v497
    %v1330 = vunpack.c.h.b16 %v497
    %v1331 = vunpack.c.l.b16 %v498
    %v1332 = vunpack.c.h.b16 %v498
    %v1333 = vunpack.c.l.b16 %v499
    %v1334 = vunpack.c.h.b16 %v499
    %v1335 = vunpack.c.l.b16 %v500
    %v1336 = vunpack.c.h.b16 %v500
    %v1337 = vunpack.c.l.b16 %v501
    %v1338 = vunpack.c.h.b16 %v501
    %v1339 = vunpack.c.l.b16 %v502
    %v1340 = vunpack.c.h.b16 %v502
    %v1341 = vunpack.c.l.b16 %v503
    %v1342 = vunpack.c.h.b16 %v503
    %v1343 = vunpack.c.l.b16 %v504
    %v1344 = vunpack.c.h.b16 %v504
    %v1345 = vunpack.c.l.b16 %v505
    %v1346 = vunpack.c.h.b16 %v505
    %v1347 = vunpack.c.l.b16 %v506
    %v1348 = vunpack.c.h.b16 %v506
    %v1349 = vunpack.c.l.b16 %v507
    %v1350 = vunpack.c.h.b16 %v507
    %v1351 = vunpack.c.l.b16 %v508
    %v1352 = vunpack.c.h.b16 %v508
    %v1353 = vunpack.c.l.b16 %v509
    %v1354 = vunpack.c.h.b16 %v509
    %v1355 = vunpack.c.l.b16 %v510
    %v1356 = vunpack.c.h.b16 %v510
    %v1357 = vunpack.c.l.b16 %v511
    %v1358 = vunpack.c.h.b16 %v511
    %v1359 = vunpack.c.l.b16 %v512
    %v1360 = vunpack.c.h.b16 %v512
    %v1361 = vunpack.c.l.b16 %v513
    %v1362 = vunpack.c.h.b16 %v513
    %v1363 = vunpack.c.l.b16 %v514
    %v1364 = vunpack.c.h.b16 %v514
    %v1365 = vunpack.c.l.b16 %v515
    %v1366 = vunpack.c.h.b16 %v515
    %v1367 = vunpack.c.l.b16 %v516
    %v1368 = vunpack.c.h.b16 %v516
    %v1369 = vunpack.c.l.b16 %v517
    %v1370 = vunpack.c.h.b16 %v517
    %v1371 = vunpack.c.l.b16 %v518
    %v1372 = vunpack.c.h.b16 %v518
    %v1373 = vunpack.c.l.b16 %v519
    %v1374 = vunpack.c.h.b16 %v519
    %v1375 = vunpack.c.l.b16 %v520
    %v1376 = vunpack.c.h.b16 %v520
    %v1377 = vunpack.c.l.b16 %v521
    %v1378 = vunpack.c.h.b16 %v521
    %v1379 = vunpack.c.l.b16 %v522
    %v1380 = vunpack.c.h.b16 %v522
    %v1381 = vunpack.c.l.b16 %v523
    %v1382 = vunpack.c.h.b16 %v523
    %v1383 = vunpack.c.l.b16 %v524
    %v1384 = vunpack.c.h.b16 %v524
    %v1385 = vunpack.c.l.b16 %v525
    %v1386 = vunpack.c.h.b16 %v525
    %v1387 = vunpack.c.l.b16 %v526
    %v1388 = vunpack.c.h.b16 %v526
    %v1389 = vunpack.c.l.b16 %v527
    %v1390 = vunpack.c.h.b16 %v527
    %v1391 = vunpack.c.l.b16 %v528
    %v1392 = vunpack.c.h.b16 %v528
    %v1393 = vunpack.c.l.b16 %v529
    %v1394 = vunpack.c.h.b16 %v529
    %v1395 = vunpack.c.l.b16 %v530
    %v1396 = vunpack.c.h.b16 %v530
    %v1397 = vunpack.c.l.b16 %v531
    %v1398 = vunpack.c.h.b16 %v531
    %v1399 = vunpack.c.l.b16 %v532
    %v1400 = vunpack.c.h.b16 %v532
    %v1401 = vunpack.c.l.b16 %v533
    %v1402 = vunpack.c.h.b16 %v533
    %v1403 = vunpack.c.l.b16 %v534
    %v1404 = vunpack.c.h.b16 %v534
    %v1405 = vunpack.c.l.b16 %v535
    %v1406 = vunpack.c.h.b16 %v535
    %v1407 = vunpack.c.l.b16 %v536
    %v1408 = vunpack.c.h.b16 %v536
    %v1409 = vunpack.c.l.b16 %v537
    %v1410 = vunpack.c.h.b16 %v537
    %v1411 = vunpack.c.l.b16 %v538
    %v1412 = vunpack.c.h.b16 %v538
    %v1413 = vunpack.c.l.b16 %v539
    %v1414 = vunpack.c.h.b16 %v539
    %v1415 = vunpack.c.l.b16 %v540
    %v1416 = vunpack.c.h.b16 %v540
    %v1417 = vunpack.c.l.b16 %v541
    %v1418 = vunpack.c.h.b16 %v541
    %v1419 = vunpack.c.l.b16 %v542
    %v1420 = vunpack.c.h.b16 %v542
    %v1421 = vunpack.c.l.b16 %v543
    %v1422 = vunpack.c.h.b16 %v543
    %v1423 = vunpack.c.l.b16 %v544
    %v1424 = vunpack.c.h.b16 %v544
    %v1425 = vunpack.c.l.b16 %v545
    %v1426 = vunpack.c.h.b16 %v545
    %v1427 = vunpack.c.l.b16 %v546
    %v1428 = vunpack.c.h.b16 %v546
    %v1429 = vunpack.c.l.b16 %v547
    %v1430 = vunpack.c.h.b16 %v547
    %v1431 = vunpack.c.l.b16 %v548
    %v1432 = vunpack.c.h.b16 %v548
    %v1433 = vunpack.c.l.b16 %v549
    %v1434 = vunpack.c.h.b16 %v549
    %v1435 = vunpack.c.l.b16 %v550
    %v1436 = vunpack.c.h.b16 %v550
    %v1437 = vunpack.c.l.b16 %v551
    %v1438 = vunpack.c.h.b16 %v551
    %v1439 = vunpack.c.l.b16 %v552
    %v1440 = vunpack.c.h.b16 %v552
    %v1441 = vunpack.c.l.b16 %v553
    %v1442 = vunpack.c.h.b16 %v553
    %v1443 = vunpack.c.l.b16 %v554
    %v1444 = vunpack.c.h.b16 %v554
    %v1445 = vunpack.c.l.b16 %v555
    %v1446 = vunpack.c.h.b16 %v555
    %v1447 = vunpack.c.l.b16 %v556
    %v1448 = vunpack.c.h.b16 %v556
    %v1449 = vunpack.c.l.b16 %v557
    %v1450 = vunpack.c.h.b16 %v557
    %v1451 = vunpack.c.l.b16 %v558
    %v1452 = vunpack.c.h.b16 %v558
    %v1453 = vunpack.c.l.b16 %v559
    %v1454 = vunpack.c.h.b16 %v559
    %v1455 = vunpack.c.l.b16 %v560
    %v1456 = vunpack.c.h.b16 %v560
    %v1457 = vunpack.c.l.b16 %v561
    %v1458 = vunpack.c.h.b16 %v561
    %v1459 = vunpack.c.l.b16 %v562
    %v1460 = vunpack.c.h.b16 %v562
    %v1461 = vunpack.c.l.b16 %v563
    %v1462 = vunpack.c.h.b16 %v563
    %v1463 = vunpack.c.l.b16 %v564
    %v1464 = vunpack.c.h.b16 %v564
    %v1465 = vunpack.c.l.b16 %v565
    %v1466 = vunpack.c.h.b16 %v565
    %v1467 = vunpack.c.l.b16 %v566
    %v1468 = vunpack.c.h.b16 %v566
    %v1469 = vunpack.c.l.b16 %v567
    %v1470 = vunpack.c.h.b16 %v567
    %v1471 = vunpack.c.l.b16 %v568
    %v1472 = vunpack.c.h.b16 %v568
    %v1473 = vunpack.c.l.b16 %v569
    %v1474 = vunpack.c.h.b16 %v569
    %v1475 = vunpack.c.l.b16 %v570
    %v1476 = vunpack.c.h.b16 %v570
    %v1477 = vunpack.c.l.b16 %v571
    %v1478 = vunpack.c.h.b16 %v571
    %v1479 = vunpack.c.l.b16 %v572
    %v1480 = vunpack.c.h.b16 %v572
    %v1481 = vunpack.c.l.b16 %v573
    %v1482 = vunpack.c.h.b16 %v573
    %v1483 = vunpack.c.l.b16 %v574
    %v1484 = vunpack.c.h.b16 %v574
    %v1485 = vunpack.c.l.b16 %v575
    %v1486 = vunpack.c.h.b16 %v575
    %v1487 = vunpack.c.l.b16 %v576
    %v1488 = vunpack.c.h.b16 %v576
    %v1489 = vunpack.c.l.b16 %v577
    %v1490 = vunpack.c.h.b16 %v577
    %v1491 = vunpack.c.l.b16 %v578
    %v1492 = vunpack.c.h.b16 %v578
    %v1493 = vunpack.c.l.b16 %v579
    %v1494 = vunpack.c.h.b16 %v579
    %v1495 = vunpack.c.l.b16 %v580
    %v1496 = vunpack.c.h.b16 %v580
    %v1497 = vunpack.c.l.b16 %v581
    %v1498 = vunpack.c.h.b16 %v581
    %v1499 = vunpack.c.l.b16 %v582
    %v1500 = vunpack.c.h.b16 %v582
    %v1501 = vunpack.c.l.b16 %v583
    %v1502 = vunpack.c.h.b16 %v583
    %v1503 = vunpack.c.l.b16 %v584
    %v1504 = vunpack.c.h.b16 %v584
    %v1505 = vunpack.c.l.b16 %v585
    %v1506 = vunpack.c.h.b16 %v585
    %v1507 = vunpack.c.l.b16 %v586
    %v1508 = vunpack.c.h.b16 %v586
    %v1509 = vunpack.c.l.b16 %v587
    %v1510 = vunpack.c.h.b16 %v587
    %v1511 = vunpack.c.l.b16 %v588
    %v1512 = vunpack.c.h.b16 %v588
    %v1513 = vunpack.c.l.b16 %v589
    %v1514 = vunpack.c.h.b16 %v589
    %v1515 = vunpack.c.l.b16 %v590
    %v1516 = vunpack.c.h.b16 %v590
    %v1517 = vunpack.c.l.b16 %v591
    %v1518 = vunpack.c.h.b16 %v591
    %v1519 = vunpack.c.l.b16 %v592
    %v1520 = vunpack.c.h.b16 %v592
    %v1521 = vunpack.c.l.b16 %v593
    %v1522 = vunpack.c.h.b16 %v593
    %v1523 = vunpack.c.l.b16 %v594
    %v1524 = vunpack.c.h.b16 %v594
    %v1525 = vunpack.c.l.b16 %v595
    %v1526 = vunpack.c.h.b16 %v595
    %v1527 = vunpack.c.l.b16 %v596
    %v1528 = vunpack.c.h.b16 %v596
    %v1529 = vunpack.c.l.b16 %v597
    %v1530 = vunpack.c.h.b16 %v597
    %v1531 = vunpack.c.l.b16 %v598
    %v1532 = vunpack.c.h.b16 %v598
    %v1533 = vunpack.c.l.b16 %v599
    %v1534 = vunpack.c.h.b16 %v599
    %v1535 = vunpack.c.l.b16 %v600
    %v1536 = vunpack.c.h.b16 %v600
    %v1537 = vunpack.c.l.b16 %v601
    %v1538 = vunpack.c.h.b16 %v601
    %v1539 = vunpack.c.l.b16 %v602
    %v1540 = vunpack.c.h.b16 %v602
    %v1541 = vunpack.c.l.b16 %v603
    %v1542 = vunpack.c.h.b16 %v603
    %v1543 = vunpack.c.l.b16 %v604
    %v1544 = vunpack.c.h.b16 %v604
    %v1545 = vunpack.c.l.b16 %v605
    %v1546 = vunpack.c.h.b16 %v605
    %v1547 = vunpack.c.l.b16 %v606
    %v1548 = vunpack.c.h.b16 %v606
    %v1549 = vunpack.c.l.b16 %v607
    %v1550 = vunpack.c.h.b16 %v607
    %v1551 = vunpack.c.l.b16 %v608
    %v1552 = vunpack.c.h.b16 %v608
    %v1553 = vunpack.c.l.b16 %v609
    %v1554 = vunpack.c.h.b16 %v609
    %v1555 = vunpack.c.l.b16 %v610
    %v1556 = vunpack.c.h.b16 %v610
    %v1557 = vunpack.c.l.b16 %v611
    %v1558 = vunpack.c.h.b16 %v611
    %v1559 = vunpack.c.l.b16 %v612
    %v1560 = vunpack.c.h.b16 %v612
    %v1561 = vunpack.c.l.b16 %v613
    %v1562 = vunpack.c.h.b16 %v613
    %v1563 = vunpack.c.l.b16 %v614
    %v1564 = vunpack.c.h.b16 %v614
    %v1565 = vunpack.c.l.b16 %v615
    %v1566 = vunpack.c.h.b16 %v615
    %v1567 = vunpack.c.l.b16 %v616
    %v1568 = vunpack.c.h.b16 %v616
    %v1569 = vunpack.c.l.b16 %v617
    %v1570 = vunpack.c.h.b16 %v617
    %v1571 = vunpack.c.l.b16 %v618
    %v1572 = vunpack.c.h.b16 %v618
    %v1573 = vunpack.c.l.b16 %v619
    %v1574 = vunpack.c.h.b16 %v619
    %v1575 = vunpack.c.l.b16 %v620
    %v1576 = vunpack.c.h.b16 %v620
    %v1577 = vunpack.c.l.b16 %v621
    %v1578 = vunpack.c.h.b16 %v621
    %v1579 = vunpack.c.l.b16 %v622
    %v1580 = vunpack.c.h.b16 %v622
    %v1581 = vunpack.c.l.b16 %v623
    %v1582 = vunpack.c.h.b16 %v623
    %v1583 = vunpack.c.l.b16 %v624
    %v1584 = vunpack.c.h.b16 %v624
    %v1585 = vpack.c.b16 %v949, %v945
    %v1586 = vpack.c.b16 %v950, %v946
    %v1587 = vpack.c.b16 %v951, %v947
    %v1588 = vpack.c.b16 %v952, %v948
    %v1589 = vpack.c.b16 %v957, %v953
    %v1590 = vpack.c.b16 %v958, %v954
    %v1591 = vpack.c.b16 %v959, %v955
    %v1592 = vpack.c.b16 %v960, %v956
    %v1593 = vpack.c.b16 %v965, %v961
    %v1594 = vpack.c.b16 %v966, %v962
    %v1595 = vpack.c.b16 %v967, %v963
    %v1596 = vpack.c.b16 %v968, %v964
    %v1597 = vpack.c.b16 %v973, %v969
    %v1598 = vpack.c.b16 %v974, %v970
    %v1599 = vpack.c.b16 %v975, %v971
    %v1600 = vpack.c.b16 %v976, %v972
    %v1601 = vpack.c.b16 %v981, %v977
    %v1602 = vpack.c.b16 %v982, %v978
    %v1603 = vpack.c.b16 %v983, %v979
    %v1604 = vpack.c.b16 %v984, %v980
    %v1605 = vpack.c.b16 %v989, %v985
    %v1606 = vpack.c.b16 %v990, %v986
    %v1607 = vpack.c.b16 %v991, %v987
    %v1608 = vpack.c.b16 %v992, %v988
    %v1609 = vpack.c.b16 %v997, %v993
    %v1610 = vpack.c.b16 %v998, %v994
    %v1611 = vpack.c.b16 %v999, %v995
    %v1612 = vpack.c.b16 %v1000, %v996
    %v1613 = vpack.c.b16 %v1005, %v1001
    %v1614 = vpack.c.b16 %v1006, %v1002
    %v1615 = vpack.c.b16 %v1007, %v1003
    %v1616 = vpack.c.b16 %v1008, %v1004
    %v1617 = vpack.c.b16 %v1013, %v1009
    %v1618 = vpack.c.b16 %v1014, %v1010
    %v1619 = vpack.c.b16 %v1015, %v1011
    %v1620 = vpack.c.b16 %v1016, %v1012
    %v1621 = vpack.c.b16 %v1021, %v1017
    %v1622 = vpack.c.b16 %v1022, %v1018
    %v1623 = vpack.c.b16 %v1023, %v1019
    %v1624 = vpack.c.b16 %v1024, %v1020
    %v1625 = vpack.c.b16 %v1029, %v1025
    %v1626 = vpack.c.b16 %v1030, %v1026
    %v1627 = vpack.c.b16 %v1031, %v1027
    %v1628 = vpack.c.b16 %v1032, %v1028
    %v1629 = vpack.c.b16 %v1037, %v1033
    %v1630 = vpack.c.b16 %v1038, %v1034
    %v1631 = vpack.c.b16 %v1039, %v1035
    %v1632 = vpack.c.b16 %v1040, %v1036
    %v1633 = vpack.c.b16 %v1045, %v1041
    %v1634 = vpack.c.b16 %v1046, %v1042
    %v1635 = vpack.c.b16 %v1047, %v1043
    %v1636 = vpack.c.b16 %v1048, %v1044
    %v1637 = vpack.c.b16 %v1053, %v1049
    %v1638 = vpack.c.b16 %v1054, %v1050
    %v1639 = vpack.c.b16 %v1055, %v1051
    %v1640 = vpack.c.b16 %v1056, %v1052
    %v1641 = vpack.c.b16 %v1061, %v1057
    %v1642 = vpack.c.b16 %v1062, %v1058
    %v1643 = vpack.c.b16 %v1063, %v1059
    %v1644 = vpack.c.b16 %v1064, %v1060
    %v1645 = vpack.c.b16 %v1069, %v1065
    %v1646 = vpack.c.b16 %v1070, %v1066
    %v1647 = vpack.c.b16 %v1071, %v1067
    %v1648 = vpack.c.b16 %v1072, %v1068
    %v1649 = vpack.c.b16 %v1077, %v1073
    %v1650 = vpack.c.b16 %v1078, %v1074
    %v1651 = vpack.c.b16 %v1079, %v1075
    %v1652 = vpack.c.b16 %v1080, %v1076
    %v1653 = vpack.c.b16 %v1085, %v1081
    %v1654 = vpack.c.b16 %v1086, %v1082
    %v1655 = vpack.c.b16 %v1087, %v1083
    %v1656 = vpack.c.b16 %v1088, %v1084
    %v1657 = vpack.c.b16 %v1093, %v1089
    %v1658 = vpack.c.b16 %v1094, %v1090
    %v1659 = vpack.c.b16 %v1095, %v1091
    %v1660 = vpack.c.b16 %v1096, %v1092
    %v1661 = vpack.c.b16 %v1101, %v1097
    %v1662 = vpack.c.b16 %v1102, %v1098
    %v1663 = vpack.c.b16 %v1103, %v1099
    %v1664 = vpack.c.b16 %v1104, %v1100
    %v1665 = vpack.c.b16 %v1109, %v1105
    %v1666 = vpack.c.b16 %v1110, %v1106
    %v1667 = vpack.c.b16 %v1111, %v1107
    %v1668 = vpack.c.b16 %v1112, %v1108
    %v1669 = vpack.c.b16 %v1117, %v1113
    %v1670 = vpack.c.b16 %v1118, %v1114
    %v1671 = vpack.c.b16 %v1119, %v1115
    %v1672 = vpack.c.b16 %v1120, %v1116
    %v1673 = vpack.c.b16 %v1125, %v1121
    %v1674 = vpack.c.b16 %v1126, %v1122
    %v1675 = vpack.c.b16 %v1127, %v1123
    %v1676 = vpack.c.b16 %v1128, %v1124
    %v1677 = vpack.c.b16 %v1133, %v1129
    %v1678 = vpack.c.b16 %v1134, %v1130
    %v1679 = vpack.c.b16 %v1135, %v1131
    %v1680 = vpack.c.b16 %v1136, %v1132
    %v1681 = vpack.c.b16 %v1141, %v1137
    %v1682 = vpack.c.b16 %v1142, %v1138
    %v1683 = vpack.c.b16 %v1143, %v1139
    %v1684 = vpack.c.b16 %v1144, %v1140
    %v1685 = vpack.c.b16 %v1149, %v1145
    %v1686 = vpack.c.b16 %v1150, %v1146
    %v1687 = vpack.c.b16 %v1151, %v1147
    %v1688 = vpack.c.b16 %v1152, %v1148
    %v1689 = vpack.c.b16 %v1157, %v1153
    %v1690 = vpack.c.b16 %v1158, %v1154
    %v1691 = vpack.c.b16 %v1159, %v1155
    %v1692 = vpack.c.b16 %v1160, %v1156
    %v1693 = vpack.c.b16 %v1165, %v1161
    %v1694 = vpack.c.b16 %v1166, %v1162
    %v1695 = vpack.c.b16 %v1167, %v1163
    %v1696 = vpack.c.b16 %v1168, %v1164
    %v1697 = vpack.c.b16 %v1173, %v1169
    %v1698 = vpack.c.b16 %v1174, %v1170
    %v1699 = vpack.c.b16 %v1175, %v1171
    %v1700 = vpack.c.b16 %v1176, %v1172
    %v1701 = vpack.c.b16 %v1181, %v1177
    %v1702 = vpack.c.b16 %v1182, %v1178
    %v1703 = vpack.c.b16 %v1183, %v1179
    %v1704 = vpack.c.b16 %v1184, %v1180
    %v1705 = vpack.c.b16 %v1189, %v1185
    %v1706 = vpack.c.b16 %v1190, %v1186
    %v1707 = vpack.c.b16 %v1191, %v1187
    %v1708 = vpack.c.b16 %v1192, %v1188
    %v1709 = vpack.c.b16 %v1197, %v1193
    %v1710 = vpack.c.b16 %v1198, %v1194
    %v1711 = vpack.c.b16 %v1199, %v1195
    %v1712 = vpack.c.b16 %v1200, %v1196
    %v1713 = vpack.c.b16 %v1205, %v1201
    %v1714 = vpack.c.b16 %v1206, %v1202
    %v1715 = vpack.c.b16 %v1207, %v1203
    %v1716 = vpack.c.b16 %v1208, %v1204
    %v1717 = vpack.c.b16 %v1213, %v1209
    %v1718 = vpack.c.b16 %v1214, %v1210
    %v1719 = vpack.c.b16 %v1215, %v1211
    %v1720 = vpack.c.b16 %v1216, %v1212
    %v1721 = vpack.c.b16 %v1221, %v1217
    %v1722 = vpack.c.b16 %v1222, %v1218
    %v1723 = vpack.c.b16 %v1223, %v1219
    %v1724 = vpack.c.b16 %v1224, %v1220
    %v1725 = vpack.c.b16 %v1229, %v1225
    %v1726 = vpack.c.b16 %v1230, %v1226
    %v1727 = vpack.c.b16 %v1231, %v1227
    %v1728 = vpack.c.b16 %v1232, %v1228
    %v1729 = vpack.c.b16 %v1237, %v1233
    %v1730 = vpack.c.b16 %v1238, %v1234
    %v1731 = vpack.c.b16 %v1239, %v1235
    %v1732 = vpack.c.b16 %v1240, %v1236
    %v1733 = vpack.c.b16 %v1245, %v1241
    %v1734 = vpack.c.b16 %v1246, %v1242
    %v1735 = vpack.c.b16 %v1247, %v1243
    %v1736 = vpack.c.b16 %v1248, %v1244
    %v1737 = vpack.c.b16 %v1253, %v1249
    %v1738 = vpack.c.b16 %v1254, %v1250
    %v1739 = vpack.c.b16 %v1255, %v1251
    %v1740 = vpack.c.b16 %v1256, %v1252
    %v1741 = vpack.c.b16 %v1261, %v1257
    %v1742 = vpack.c.b16 %v1262, %v1258
    %v1743 = vpack.c.b16 %v1263, %v1259
    %v1744 = vpack.c.b16 %v1264, %v1260
    %v1745 = vpack.c.b16 %v1269, %v1265
    %v1746 = vpack.c.b16 %v1270, %v1266
    %v1747 = vpack.c.b16 %v1271, %v1267
    %v1748 = vpack.c.b16 %v1272, %v1268
    %v1749 = vpack.c.b16 %v1277, %v1273
    %v1750 = vpack.c.b16 %v1278, %v1274
    %v1751 = vpack.c.b16 %v1279, %v1275
    %v1752 = vpack.c.b16 %v1280, %v1276
    %v1753 = vpack.c.b16 %v1285, %v1281
    %v1754 = vpack.c.b16 %v1286, %v1282
    %v1755 = vpack.c.b16 %v1287, %v1283
    %v1756 = vpack.c.b16 %v1288, %v1284
    %v1757 = vpack.c.b16 %v1293, %v1289
    %v1758 = vpack.c.b16 %v1294, %v1290
    %v1759 = vpack.c.b16 %v1295, %v1291
    %v1760 = vpack.c.b16 %v1296, %v1292
    %v1761 = vpack.c.b16 %v1301, %v1297
    %v1762 = vpack.c.b16 %v1302, %v1298
    %v1763 = vpack.c.b16 %v1303, %v1299
    %v1764 = vpack.c.b16 %v1304, %v1300
    %v1765 = vpack.c.b16 %v1309, %v1305
    %v1766 = vpack.c.b16 %v1310, %v1306
    %v1767 = vpack.c.b16 %v1311, %v1307
    %v1768 = vpack.c.b16 %v1312, %v1308
    %v1769 = vpack.c.b16 %v1317, %v1313
    %v1770 = vpack.c.b16 %v1318, %v1314
    %v1771 = vpack.c.b16 %v1319, %v1315
    %v1772 = vpack.c.b16 %v1320, %v1316
    %v1773 = vpack.c.b16 %v1325, %v1321
    %v1774 = vpack.c.b16 %v1326, %v1322
    %v1775 = vpack.c.b16 %v1327, %v1323
    %v1776 = vpack.c.b16 %v1328, %v1324
    %v1777 = vpack.c.b16 %v1333, %v1329
    %v1778 = vpack.c.b16 %v1334, %v1330
    %v1779 = vpack.c.b16 %v1335, %v1331
    %v1780 = vpack.c.b16 %v1336, %v1332
    %v1781 = vpack.c.b16 %v1341, %v1337
    %v1782 = vpack.c.b16 %v1342, %v1338
    %v1783 = vpack.c.b16 %v1343, %v1339
    %v1784 = vpack.c.b16 %v1344, %v1340
    %v1785 = vpack.c.b16 %v1349, %v1345
    %v1786 = vpack.c.b16 %v1350, %v1346
    %v1787 = vpack.c.b16 %v1351, %v1347
    %v1788 = vpack.c.b16 %v1352, %v1348
    %v1789 = vpack.c.b16 %v1357, %v1353
    %v1790 = vpack.c.b16 %v1358, %v1354
    %v1791 = vpack.c.b16 %v1359, %v1355
    %v1792 = vpack.c.b16 %v1360, %v1356
    %v1793 = vpack.c.b16 %v1365, %v1361
    %v1794 = vpack.c.b16 %v1366, %v1362
    %v1795 = vpack.c.b16 %v1367, %v1363
    %v1796 = vpack.c.b16 %v1368, %v1364
    %v1797 = vpack.c.b16 %v1373, %v1369
    %v1798 = vpack.c.b16 %v1374, %v1370
    %v1799 = vpack.c.b16 %v1375, %v1371
    %v1800 = vpack.c.b16 %v1376, %v1372
    %v1801 = vpack.c.b16 %v1381, %v1377
    %v1802 = vpack.c.b16 %v1382, %v1378
    %v1803 = vpack.c.b16 %v1383, %v1379
    %v1804 = vpack.c.b16 %v1384, %v1380
    %v1805 = vpack.c.b16 %v1389, %v1385
    %v1806 = vpack.c.b16 %v1390, %v1386
    %v1807 = vpack.c.b16 %v1391, %v1387
    %v1808 = vpack.c.b16 %v1392, %v1388
    %v1809 = vpack.c.b16 %v1397, %v1393
    %v1810 = vpack.c.b16 %v1398, %v1394
    %v1811 = vpack.c.b16 %v1399, %v1395
    %v1812 = vpack.c.b16 %v1400, %v1396
    %v1813 = vpack.c.b16 %v1405, %v1401
    %v1814 = vpack.c.b16 %v1406, %v1402
    %v1815 = vpack.c.b16 %v1407, %v1403
    %v1816 = vpack.c.b16 %v1408, %v1404
    %v1817 = vpack.c.b16 %v1413, %v1409
    %v1818 = vpack.c.b16 %v1414, %v1410
    %v1819 = vpack.c.b16 %v1415, %v1411
    %v1820 = vpack.c.b16 %v1416, %v1412
    %v1821 = vpack.c.b16 %v1421, %v1417
    %v1822 = vpack.c.b16 %v1422, %v1418
    %v1823 = vpack.c.b16 %v1423, %v1419
    %v1824 = vpack.c.b16 %v1424, %v1420
    %v1825 = vpack.c.b16 %v1429, %v1425
    %v1826 = vpack.c.b16 %v1430, %v1426
    %v1827 = vpack.c.b16 %v1431, %v1427
    %v1828 = vpack.c.b16 %v1432, %v1428
    %v1829 = vpack.c.b16 %v1437, %v1433
    %v1830 = vpack.c.b16 %v1438, %v1434
    %v1831 = vpack.c.b16 %v1439, %v1435
    %v1832 = vpack.c.b16 %v1440, %v1436
    %v1833 = vpack.c.b16 %v1445, %v1441
    %v1834 = vpack.c.b16 %v1446, %v1442
    %v1835 = vpack.c.b16 %v1447, %v1443
    %v1836 = vpack.c.b16 %v1448, %v1444
    %v1837 = vpack.c.b16 %v1453, %v1449
    %v1838 = vpack.c.b16 %v1454, %v1450
    %v1839 = vpack.c.b16 %v1455, %v1451
    %v1840 = vpack.c.b16 %v1456, %v1452
    %v1841 = vpack.c.b16 %v1461, %v1457
    %v1842 = vpack.c.b16 %v1462, %v1458
    %v1843 = vpack.c.b16 %v1463, %v1459
    %v1844 = vpack.c.b16 %v1464, %v1460
    %v1845 = vpack.c.b16 %v1469, %v1465
    %v1846 = vpack.c.b16 %v1470, %v1466
    %v1847 = vpack.c.b16 %v1471, %v1467
    %v1848 = vpack.c.b16 %v1472, %v1468
    %v1849 = vpack.c.b16 %v1477, %v1473
    %v1850 = vpack.c.b16 %v1478, %v1474
    %v1851 = vpack.c.b16 %v1479, %v1475
    %v1852 = vpack.c.b16 %v1480, %v1476
    %v1853 = vpack.c.b16 %v1485, %v1481
    %v1854 = vpack.c.b16 %v1486, %v1482
    %v1855 = vpack.c.b16 %v1487, %v1483
    %v1856 = vpack.c.b16 %v1488, %v1484
    %v1857 = vpack.c.b16 %v1493, %v1489
    %v1858 = vpack.c.b16 %v1494, %v1490
    %v1859 = vpack.c.b16 %v1495, %v1491
    %v1860 = vpack.c.b16 %v1496, %v1492
    %v1861 = vpack.c.b16 %v1501, %v1497
    %v1862 = vpack.c.b16 %v1502, %v1498
    %v1863 = vpack.c.b16 %v1503, %v1499
    %v1864 = vpack.c.b16 %v1504, %v1500
    %v1865 = vpack.c.b16 %v1509, %v1505
    %v1866 = vpack.c.b16 %v1510, %v1506
    %v1867 = vpack.c.b16 %v1511, %v1507
    %v1868 = vpack.c.b16 %v1512, %v1508
    %v1869 = vpack.c.b16 %v1517, %v1513
    %v1870 = vpack.c.b16 %v1518, %v1514
    %v1871 = vpack.c.b16 %v1519, %v1515
    %v1872 = vpack.c.b16 %v1520, %v1516
    %v1873 = vpack.c.b16 %v1525, %v1521
    %v1874 = vpack.c.b16 %v1526, %v1522
    %v1875 = vpack.c.b16 %v1527, %v1523
    %v1876 = vpack.c.b16 %v1528, %v1524
    %v1877 = vpack.c.b16 %v1533, %v1529
    %v1878 = vpack.c.b16 %v1534, %v1530
    %v1879 = vpack.c.b16 %v1535, %v1531
    %v1880 = vpack.c.b16 %v1536, %v1532
    %v1881 = vpack.c.b16 %v1541, %v1537
    %v1882 = vpack.c.b16 %v1542, %v1538
    %v1883 = vpack.c.b16 %v1543, %v1539
    %v1884 = vpack.c.b16 %v1544, %v1540
    %v1885 = vpack.c.b16 %v1549, %v1545
    %v1886 = vpack.c.b16 %v1550, %v1546
    %v1887 = vpack.c.b16 %v1551, %v1547
    %v1888 = vpack.c.b16 %v1552, %v1548
    %v1889 = vpack.c.b16 %v1557, %v1553
    %v1890 = vpack.c.b16 %v1558, %v1554
    %v1891 = vpack.c.b16 %v1559, %v1555
    %v1892 = vpack.c.b16 %v1560, %v1556
    %v1893 = vpack.c.b16 %v1565, %v1561
    %v1894 = vpack.c.b16 %v1566, %v1562
    %v1895 = vpack.c.b16 %v1567, %v1563
    %v1896 = vpack.c.b16 %v1568, %v1564
    %v1897 = vpack.c.b16 %v1573, %v1569
    %v1898 = vpack.c.b16 %v1574, %v1570
    %v1899 = vpack.c.b16 %v1575, %v1571
    %v1900 = vpack.c.b16 %v1576, %v1572
    %v1901 = vpack.c.b16 %v1581, %v1577
    %v1902 = vpack.c.b16 %v1582, %v1578
    %v1903 = vpack.c.b16 %v1583, %v1579
    %v1904 = vpack.c.b16 %v1584, %v1580
    %2225 = vmatprep.subr.bf16.mxu0 %v1586
    %2226 = vmatpush1.bf16.msra.mxu0 %v1585
    %2227 = vmatprep.subr.bf16.mxu0 %v1590
    %2228 = vmatpush1.bf16.msra.mxu0 %v1589
    %2229 = vmatprep.subr.bf16.mxu0 %v1594
    %2230 = vmatpush1.bf16.msra.mxu0 %v1593
    %2231 = vmatprep.subr.bf16.mxu0 %v1598
    %2232 = vmatpush1.bf16.msra.mxu0 %v1597
    %2233 = vmatprep.subr.bf16.mxu0 %v1602
    %2234 = vmatpush1.bf16.msra.mxu0 %v1601
    %2235 = vmatprep.subr.bf16.mxu0 %v1606
    %2236 = vmatpush1.bf16.msra.mxu0 %v1605
    %2237 = vmatprep.subr.bf16.mxu0 %v1610
    %2238 = vmatpush1.bf16.msra.mxu0 %v1609
    %2239 = vmatprep.subr.bf16.mxu0 %v1614
    %2240 = vmatpush1.bf16.msra.mxu0 %v1613
    %2241 = vmatprep.subr.bf16.mxu0 %v1618
    %2242 = vmatpush1.bf16.msra.mxu0 %v1617
    %2243 = vmatprep.subr.bf16.mxu0 %v1622
    %2244 = vmatpush1.bf16.msra.mxu0 %v1621
    %2245 = vmatprep.subr.bf16.mxu0 %v1626
    %2246 = vmatpush1.bf16.msra.mxu0 %v1625
    %2247 = vmatprep.subr.bf16.mxu0 %v1630
    %2248 = vmatpush1.bf16.msra.mxu0 %v1629
    %2249 = vmatprep.subr.bf16.mxu0 %v1634
    %2250 = vmatpush1.bf16.msra.mxu0 %v1633
    %2251 = vmatprep.subr.bf16.mxu0 %v1638
    %2252 = vmatpush1.bf16.msra.mxu0 %v1637
    %2253 = vmatprep.subr.bf16.mxu0 %v1642
    %2254 = vmatpush1.bf16.msra.mxu0 %v1641
    %2255 = vmatprep.subr.bf16.mxu0 %v1646
    %2256 = vmatpush1.bf16.msra.mxu0 %v1645
    %2257 = vmatprep.mubr.bf16.mxu0 %v271
    %2258 = vmatmul.mubr.bf16.gmra.mrb[0].mxu0 %v267
    %v2259 = vpop.f32.mrb[0].mxu0
    %v2260 = vadd.f32 0.0, %v2259
    %v2261 = vpop.f32.mrb[0].mxu0
    %v2262 = vadd.f32 0.0, %v2261
    %v2263 = vpop.f32.mrb[0].mxu0
    %v2264 = vadd.f32 0.0, %v2263
    %v2265 = vpop.f32.mrb[0].mxu0
    %v2266 = vadd.f32 0.0, %v2265
    %2267 = vdwg.mxu0
    %2268 = vmatprep.subr.bf16.mxu0 %v1650
    %2269 = vmatpush1.bf16.msra.mxu0 %v1649
    %2270 = vmatprep.subr.bf16.mxu0 %v1654
    %2271 = vmatpush1.bf16.msra.mxu0 %v1653
    %2272 = vmatprep.subr.bf16.mxu0 %v1658
    %2273 = vmatpush1.bf16.msra.mxu0 %v1657
    %2274 = vmatprep.subr.bf16.mxu0 %v1662
    %2275 = vmatpush1.bf16.msra.mxu0 %v1661
    %2276 = vmatprep.subr.bf16.mxu0 %v1666
    %2277 = vmatpush1.bf16.msra.mxu0 %v1665
    %2278 = vmatprep.subr.bf16.mxu0 %v1670
    %2279 = vmatpush1.bf16.msra.mxu0 %v1669
    %2280 = vmatprep.subr.bf16.mxu0 %v1674
    %2281 = vmatpush1.bf16.msra.mxu0 %v1673
    %2282 = vmatprep.subr.bf16.mxu0 %v1678
    %2283 = vmatpush1.bf16.msra.mxu0 %v1677
    %2284 = vmatprep.subr.bf16.mxu0 %v1682
    %2285 = vmatpush1.bf16.msra.mxu0 %v1681
    %2286 = vmatprep.subr.bf16.mxu0 %v1686
    %2287 = vmatpush1.bf16.msra.mxu0 %v1685
    %2288 = vmatprep.subr.bf16.mxu0 %v1690
    %2289 = vmatpush1.bf16.msra.mxu0 %v1689
    %2290 = vmatprep.subr.bf16.mxu0 %v1694
    %2291 = vmatpush1.bf16.msra.mxu0 %v1693
    %2292 = vmatprep.subr.bf16.mxu0 %v1698
    %2293 = vmatpush1.bf16.msra.mxu0 %v1697
    %2294 = vmatprep.subr.bf16.mxu0 %v1702
    %2295 = vmatpush1.bf16.msra.mxu0 %v1701
    %2296 = vmatprep.subr.bf16.mxu0 %v1706
    %2297 = vmatpush1.bf16.msra.mxu0 %v1705
    %2298 = vmatprep.subr.bf16.mxu0 %v1710
    %2299 = vmatpush1.bf16.msra.mxu0 %v1709
    %2300 = vmatprep.mubr.bf16.mxu0 %v279
    %2301 = vmatmul.mubr.bf16.gmra.mrb[0].mxu0 %v275
    %v2302 = vpop.f32.mrb[0].mxu0
    %v2303 = vadd.f32 %v2260, %v2302
    %v2304 = vpop.f32.mrb[0].mxu0
    %v2305 = vadd.f32 %v2262, %v2304
    %v2306 = vpop.f32.mrb[0].mxu0
    %v2307 = vadd.f32 %v2264, %v2306
    %v2308 = vpop.f32.mrb[0].mxu0
    %v2309 = vadd.f32 %v2266, %v2308
    %2310 = vdwg.mxu0
    %2311 = vmatprep.subr.bf16.mxu0 %v1714
    %2312 = vmatpush1.bf16.msra.mxu0 %v1713
    %2313 = vmatprep.subr.bf16.mxu0 %v1718
    %2314 = vmatpush1.bf16.msra.mxu0 %v1717
    %2315 = vmatprep.subr.bf16.mxu0 %v1722
    %2316 = vmatpush1.bf16.msra.mxu0 %v1721
    %2317 = vmatprep.subr.bf16.mxu0 %v1726
    %2318 = vmatpush1.bf16.msra.mxu0 %v1725
    %2319 = vmatprep.subr.bf16.mxu0 %v1730
    %2320 = vmatpush1.bf16.msra.mxu0 %v1729
    %2321 = vmatprep.subr.bf16.mxu0 %v1734
    %2322 = vmatpush1.bf16.msra.mxu0 %v1733
    %2323 = vmatprep.subr.bf16.mxu0 %v1738
    %2324 = vmatpush1.bf16.msra.mxu0 %v1737
    %2325 = vmatprep.subr.bf16.mxu0 %v1742
    %2326 = vmatpush1.bf16.msra.mxu0 %v1741
    %2327 = vmatprep.subr.bf16.mxu0 %v1746
    %2328 = vmatpush1.bf16.msra.mxu0 %v1745
    %2329 = vmatprep.subr.bf16.mxu0 %v1750
    %2330 = vmatpush1.bf16.msra.mxu0 %v1749
    %2331 = vmatprep.subr.bf16.mxu0 %v1754
    %2332 = vmatpush1.bf16.msra.mxu0 %v1753
    %2333 = vmatprep.subr.bf16.mxu0 %v1758
    %2334 = vmatpush1.bf16.msra.mxu0 %v1757
    %2335 = vmatprep.subr.bf16.mxu0 %v1762
    %2336 = vmatpush1.bf16.msra.mxu0 %v1761
    %2337 = vmatprep.subr.bf16.mxu0 %v1766
    %2338 = vmatpush1.bf16.msra.mxu0 %v1765
    %2339 = vmatprep.subr.bf16.mxu0 %v1770
    %2340 = vmatpush1.bf16.msra.mxu0 %v1769
    %2341 = vmatprep.subr.bf16.mxu0 %v1774
    %2342 = vmatpush1.bf16.msra.mxu0 %v1773
    %2343 = vmatprep.mubr.bf16.mxu0 %v287
    %2344 = vmatmul.mubr.bf16.gmra.mrb[0].mxu0 %v283
    %v2345 = vpop.f32.mrb[0].mxu0
    %v2346 = vadd.f32 %v2303, %v2345
    %v2347 = vpop.f32.mrb[0].mxu0
    %v2348 = vadd.f32 %v2305, %v2347
    %v2349 = vpop.f32.mrb[0].mxu0
    %v2350 = vadd.f32 %v2307, %v2349
    %v2351 = vpop.f32.mrb[0].mxu0
    %v2352 = vadd.f32 %v2309, %v2351
    %2353 = vdwg.mxu0
    %2354 = vmatprep.subr.bf16.mxu0 %v1778
    %2355 = vmatpush1.bf16.msra.mxu0 %v1777
    %2356 = vmatprep.subr.bf16.mxu0 %v1782
    %2357 = vmatpush1.bf16.msra.mxu0 %v1781
    %2358 = vmatprep.subr.bf16.mxu0 %v1786
    %2359 = vmatpush1.bf16.msra.mxu0 %v1785
    %2360 = vmatprep.subr.bf16.mxu0 %v1790
    %2361 = vmatpush1.bf16.msra.mxu0 %v1789
    %2362 = vmatprep.subr.bf16.mxu0 %v1794
    %2363 = vmatpush1.bf16.msra.mxu0 %v1793
    %2364 = vmatprep.subr.bf16.mxu0 %v1798
    %2365 = vmatpush1.bf16.msra.mxu0 %v1797
    %2366 = vmatprep.subr.bf16.mxu0 %v1802
    %2367 = vmatpush1.bf16.msra.mxu0 %v1801
    %2368 = vmatprep.subr.bf16.mxu0 %v1806
    %2369 = vmatpush1.bf16.msra.mxu0 %v1805
    %2370 = vmatprep.subr.bf16.mxu0 %v1810
    %2371 = vmatpush1.bf16.msra.mxu0 %v1809
    %2372 = vmatprep.subr.bf16.mxu0 %v1814
    %2373 = vmatpush1.bf16.msra.mxu0 %v1813
    %2374 = vmatprep.subr.bf16.mxu0 %v1818
    %2375 = vmatpush1.bf16.msra.mxu0 %v1817
    %2376 = vmatprep.subr.bf16.mxu0 %v1822
    %2377 = vmatpush1.bf16.msra.mxu0 %v1821
    %2378 = vmatprep.subr.bf16.mxu0 %v1826
    %2379 = vmatpush1.bf16.msra.mxu0 %v1825
    %2380 = vmatprep.subr.bf16.mxu0 %v1830
    %2381 = vmatpush1.bf16.msra.mxu0 %v1829
    %2382 = vmatprep.subr.bf16.mxu0 %v1834
    %2383 = vmatpush1.bf16.msra.mxu0 %v1833
    %2384 = vmatprep.subr.bf16.mxu0 %v1838
    %2385 = vmatpush1.bf16.msra.mxu0 %v1837
    %2386 = vmatprep.mubr.bf16.mxu0 %v295
    %2387 = vmatmul.mubr.bf16.gmra.mrb[0].mxu0 %v291
    %v2388 = vpop.f32.mrb[0].mxu0
    %v2389 = vadd.f32 %v2346, %v2388
    %v2390 = vpop.f32.mrb[0].mxu0
    %v2391 = vadd.f32 %v2348, %v2390
    %v2392 = vpop.f32.mrb[0].mxu0
    %v2393 = vadd.f32 %v2350, %v2392
    %v2394 = vpop.f32.mrb[0].mxu0
    %v2395 = vadd.f32 %v2352, %v2394
    %2396 = vdwg.mxu0
    %2397 = vmatprep.subr.bf16.mxu0 %v1842
    %2398 = vmatpush1.bf16.msra.mxu0 %v1841
    %2399 = vmatprep.subr.bf16.mxu0 %v1846
    %2400 = vmatpush1.bf16.msra.mxu0 %v1845
    %2401 = vmatprep.subr.bf16.mxu0 %v1850
    %2402 = vmatpush1.bf16.msra.mxu0 %v1849
    %2403 = vmatprep.subr.bf16.mxu0 %v1854
    %2404 = vmatpush1.bf16.msra.mxu0 %v1853
    %2405 = vmatprep.subr.bf16.mxu0 %v1858
    %2406 = vmatpush1.bf16.msra.mxu0 %v1857
    %2407 = vmatprep.subr.bf16.mxu0 %v1862
    %2408 = vmatpush1.bf16.msra.mxu0 %v1861
    %2409 = vmatprep.subr.bf16.mxu0 %v1866
    %2410 = vmatpush1.bf16.msra.mxu0 %v1865
    %2411 = vmatprep.subr.bf16.mxu0 %v1870
    %2412 = vmatpush1.bf16.msra.mxu0 %v1869
    %2413 = vmatprep.subr.bf16.mxu0 %v1874
    %2414 = vmatpush1.bf16.msra.mxu0 %v1873
    %2415 = vmatprep.subr.bf16.mxu0 %v1878
    %2416 = vmatpush1.bf16.msra.mxu0 %v1877
    %2417 = vmatprep.subr.bf16.mxu0 %v1882
    %2418 = vmatpush1.bf16.msra.mxu0 %v1881
    %2419 = vmatprep.subr.bf16.mxu0 %v1886
    %2420 = vmatpush1.bf16.msra.mxu0 %v1885
    %2421 = vmatprep.subr.bf16.mxu0 %v1890
    %2422 = vmatpush1.bf16.msra.mxu0 %v1889
    %2423 = vmatprep.subr.bf16.mxu0 %v1894
    %2424 = vmatpush1.bf16.msra.mxu0 %v1893
    %2425 = vmatprep.subr.bf16.mxu0 %v1898
    %2426 = vmatpush1.bf16.msra.mxu0 %v1897
    %2427 = vmatprep.subr.bf16.mxu0 %v1902
    %2428 = vmatpush1.bf16.msra.mxu0 %v1901
    %2429 = vmatprep.mubr.bf16.mxu0 %v303
    %2430 = vmatmul.mubr.bf16.gmra.mrb[0].mxu0 %v299
    %v2431 = vpop.f32.mrb[0].mxu0
    %v2432 = vadd.f32 %v2389, %v2431
    %v2433 = vpop.f32.mrb[0].mxu0
    %v2434 = vadd.f32 %v2391, %v2433
    %v2435 = vpop.f32.mrb[0].mxu0
    %v2436 = vadd.f32 %v2393, %v2435
    %v2437 = vpop.f32.mrb[0].mxu0
    %v2438 = vadd.f32 %v2395, %v2437
    %2439 = vdwg.mxu0
    %2440 = vmatprep.subr.bf16.mxu0 %v1588
    %2441 = vmatpush1.bf16.msra.mxu0 %v1587
    %2442 = vmatprep.subr.bf16.mxu0 %v1592
    %2443 = vmatpush1.bf16.msra.mxu0 %v1591
    %2444 = vmatprep.subr.bf16.mxu0 %v1596
    %2445 = vmatpush1.bf16.msra.mxu0 %v1595
    %2446 = vmatprep.subr.bf16.mxu0 %v1600
    %2447 = vmatpush1.bf16.msra.mxu0 %v1599
    %2448 = vmatprep.subr.bf16.mxu0 %v1604
    %2449 = vmatpush1.bf16.msra.mxu0 %v1603
    %2450 = vmatprep.subr.bf16.mxu0 %v1608
    %2451 = vmatpush1.bf16.msra.mxu0 %v1607
    %2452 = vmatprep.subr.bf16.mxu0 %v1612
    %2453 = vmatpush1.bf16.msra.mxu0 %v1611
    %2454 = vmatprep.subr.bf16.mxu0 %v1616
    %2455 = vmatpush1.bf16.msra.mxu0 %v1615
    %2456 = vmatprep.subr.bf16.mxu0 %v1620
    %2457 = vmatpush1.bf16.msra.mxu0 %v1619
    %2458 = vmatprep.subr.bf16.mxu0 %v1624
    %2459 = vmatpush1.bf16.msra.mxu0 %v1623
    %2460 = vmatprep.subr.bf16.mxu0 %v1628
    %2461 = vmatpush1.bf16.msra.mxu0 %v1627
    %2462 = vmatprep.subr.bf16.mxu0 %v1632
    %2463 = vmatpush1.bf16.msra.mxu0 %v1631
    %2464 = vmatprep.subr.bf16.mxu0 %v1636
    %2465 = vmatpush1.bf16.msra.mxu0 %v1635
    %2466 = vmatprep.subr.bf16.mxu0 %v1640
    %2467 = vmatpush1.bf16.msra.mxu0 %v1639
    %2468 = vmatprep.subr.bf16.mxu0 %v1644
    %2469 = vmatpush1.bf16.msra.mxu0 %v1643
    %2470 = vmatprep.subr.bf16.mxu0 %v1648
    %2471 = vmatpush1.bf16.msra.mxu0 %v1647
    %2472 = vmatprep.mubr.bf16.mxu0 %v271
    %2473 = vmatmul.mubr.bf16.gmra.mrb[0].mxu0 %v267
    %v2474 = vpop.f32.mrb[0].mxu0
    %v2475 = vadd.f32 0.0, %v2474
    %v2476 = vpop.f32.mrb[0].mxu0
    %v2477 = vadd.f32 0.0, %v2476
    %v2478 = vpop.f32.mrb[0].mxu0
    %v2479 = vadd.f32 0.0, %v2478
    %v2480 = vpop.f32.mrb[0].mxu0
    %v2481 = vadd.f32 0.0, %v2480
    %2482 = vdwg.mxu0
    %2483 = vmatprep.subr.bf16.mxu0 %v1652
    %2484 = vmatpush1.bf16.msra.mxu0 %v1651
    %2485 = vmatprep.subr.bf16.mxu0 %v1656
    %2486 = vmatpush1.bf16.msra.mxu0 %v1655
    %2487 = vmatprep.subr.bf16.mxu0 %v1660
    %2488 = vmatpush1.bf16.msra.mxu0 %v1659
    %2489 = vmatprep.subr.bf16.mxu0 %v1664
    %2490 = vmatpush1.bf16.msra.mxu0 %v1663
    %2491 = vmatprep.subr.bf16.mxu0 %v1668
    %2492 = vmatpush1.bf16.msra.mxu0 %v1667
    %2493 = vmatprep.subr.bf16.mxu0 %v1672
    %2494 = vmatpush1.bf16.msra.mxu0 %v1671
    %2495 = vmatprep.subr.bf16.mxu0 %v1676
    %2496 = vmatpush1.bf16.msra.mxu0 %v1675
    %2497 = vmatprep.subr.bf16.mxu0 %v1680
    %2498 = vmatpush1.bf16.msra.mxu0 %v1679
    %2499 = vmatprep.subr.bf16.mxu0 %v1684
    %2500 = vmatpush1.bf16.msra.mxu0 %v1683
    %2501 = vmatprep.subr.bf16.mxu0 %v1688
    %2502 = vmatpush1.bf16.msra.mxu0 %v1687
    %2503 = vmatprep.subr.bf16.mxu0 %v1692
    %2504 = vmatpush1.bf16.msra.mxu0 %v1691
    %2505 = vmatprep.subr.bf16.mxu0 %v1696
    %2506 = vmatpush1.bf16.msra.mxu0 %v1695
    %2507 = vmatprep.subr.bf16.mxu0 %v1700
    %2508 = vmatpush1.bf16.msra.mxu0 %v1699
    %2509 = vmatprep.subr.bf16.mxu0 %v1704
    %2510 = vmatpush1.bf16.msra.mxu0 %v1703
    %2511 = vmatprep.subr.bf16.mxu0 %v1708
    %2512 = vmatpush1.bf16.msra.mxu0 %v1707
    %2513 = vmatprep.subr.bf16.mxu0 %v1712
    %2514 = vmatpush1.bf16.msra.mxu0 %v1711
    %2515 = vmatprep.mubr.bf16.mxu0 %v279
    %2516 = vmatmul.mubr.bf16.gmra.mrb[0].mxu0 %v275
    %v2517 = vpop.f32.mrb[0].mxu0
    %v2518 = vadd.f32 %v2475, %v2517
    %v2519 = vpop.f32.mrb[0].mxu0
    %v2520 = vadd.f32 %v2477, %v2519
    %v2521 = vpop.f32.mrb[0].mxu0
    %v2522 = vadd.f32 %v2479, %v2521
    %v2523 = vpop.f32.mrb[0].mxu0
    %v2524 = vadd.f32 %v2481, %v2523
    %2525 = vdwg.mxu0
    %2526 = vmatprep.subr.bf16.mxu0 %v1716
    %2527 = vmatpush1.bf16.msra.mxu0 %v1715
    %2528 = vmatprep.subr.bf16.mxu0 %v1720
    %2529 = vmatpush1.bf16.msra.mxu0 %v1719
    %2530 = vmatprep.subr.bf16.mxu0 %v1724
    %2531 = vmatpush1.bf16.msra.mxu0 %v1723
    %2532 = vmatprep.subr.bf16.mxu0 %v1728
    %2533 = vmatpush1.bf16.msra.mxu0 %v1727
    %2534 = vmatprep.subr.bf16.mxu0 %v1732
    %2535 = vmatpush1.bf16.msra.mxu0 %v1731
    %2536 = vmatprep.subr.bf16.mxu0 %v1736
    %2537 = vmatpush1.bf16.msra.mxu0 %v1735
    %2538 = vmatprep.subr.bf16.mxu0 %v1740
    %2539 = vmatpush1.bf16.msra.mxu0 %v1739
    %2540 = vmatprep.subr.bf16.mxu0 %v1744
    %2541 = vmatpush1.bf16.msra.mxu0 %v1743
    %2542 = vmatprep.subr.bf16.mxu0 %v1748
    %2543 = vmatpush1.bf16.msra.mxu0 %v1747
    %2544 = vmatprep.subr.bf16.mxu0 %v1752
    %2545 = vmatpush1.bf16.msra.mxu0 %v1751
    %2546 = vmatprep.subr.bf16.mxu0 %v1756
    %2547 = vmatpush1.bf16.msra.mxu0 %v1755
    %2548 = vmatprep.subr.bf16.mxu0 %v1760
    %2549 = vmatpush1.bf16.msra.mxu0 %v1759
    %2550 = vmatprep.subr.bf16.mxu0 %v1764
    %2551 = vmatpush1.bf16.msra.mxu0 %v1763
    %2552 = vmatprep.subr.bf16.mxu0 %v1768
    %2553 = vmatpush1.bf16.msra.mxu0 %v1767
    %2554 = vmatprep.subr.bf16.mxu0 %v1772
    %2555 = vmatpush1.bf16.msra.mxu0 %v1771
    %2556 = vmatprep.subr.bf16.mxu0 %v1776
    %2557 = vmatpush1.bf16.msra.mxu0 %v1775
    %2558 = vmatprep.mubr.bf16.mxu0 %v287
    %2559 = vmatmul.mubr.bf16.gmra.mrb[0].mxu0 %v283
    %v2560 = vpop.f32.mrb[0].mxu0
    %v2561 = vadd.f32 %v2518, %v2560
    %v2562 = vpop.f32.mrb[0].mxu0
    %v2563 = vadd.f32 %v2520, %v2562
    %v2564 = vpop.f32.mrb[0].mxu0
    %v2565 = vadd.f32 %v2522, %v2564
    %v2566 = vpop.f32.mrb[0].mxu0
    %v2567 = vadd.f32 %v2524, %v2566
    %2568 = vdwg.mxu0
    %2569 = vmatprep.subr.bf16.mxu0 %v1780
    %2570 = vmatpush1.bf16.msra.mxu0 %v1779
    %2571 = vmatprep.subr.bf16.mxu0 %v1784
    %2572 = vmatpush1.bf16.msra.mxu0 %v1783
    %2573 = vmatprep.subr.bf16.mxu0 %v1788
    %2574 = vmatpush1.bf16.msra.mxu0 %v1787
    %2575 = vmatprep.subr.bf16.mxu0 %v1792
    %2576 = vmatpush1.bf16.msra.mxu0 %v1791
    %2577 = vmatprep.subr.bf16.mxu0 %v1796
    %2578 = vmatpush1.bf16.msra.mxu0 %v1795
    %2579 = vmatprep.subr.bf16.mxu0 %v1800
    %2580 = vmatpush1.bf16.msra.mxu0 %v1799
    %2581 = vmatprep.subr.bf16.mxu0 %v1804
    %2582 = vmatpush1.bf16.msra.mxu0 %v1803
    %2583 = vmatprep.subr.bf16.mxu0 %v1808
    %2584 = vmatpush1.bf16.msra.mxu0 %v1807
    %2585 = vmatprep.subr.bf16.mxu0 %v1812
    %2586 = vmatpush1.bf16.msra.mxu0 %v1811
    %2587 = vmatprep.subr.bf16.mxu0 %v1816
    %2588 = vmatpush1.bf16.msra.mxu0 %v1815
    %2589 = vmatprep.subr.bf16.mxu0 %v1820
    %2590 = vmatpush1.bf16.msra.mxu0 %v1819
    %2591 = vmatprep.subr.bf16.mxu0 %v1824
    %2592 = vmatpush1.bf16.msra.mxu0 %v1823
    %2593 = vmatprep.subr.bf16.mxu0 %v1828
    %2594 = vmatpush1.bf16.msra.mxu0 %v1827
    %2595 = vmatprep.subr.bf16.mxu0 %v1832
    %2596 = vmatpush1.bf16.msra.mxu0 %v1831
    %2597 = vmatprep.subr.bf16.mxu0 %v1836
    %2598 = vmatpush1.bf16.msra.mxu0 %v1835
    %2599 = vmatprep.subr.bf16.mxu0 %v1840
    %2600 = vmatpush1.bf16.msra.mxu0 %v1839
    %2601 = vmatprep.mubr.bf16.mxu0 %v295
    %2602 = vmatmul.mubr.bf16.gmra.mrb[0].mxu0 %v291
    %v2603 = vpop.f32.mrb[0].mxu0
    %v2604 = vadd.f32 %v2561, %v2603
    %v2605 = vpop.f32.mrb[0].mxu0
    %v2606 = vadd.f32 %v2563, %v2605
    %v2607 = vpop.f32.mrb[0].mxu0
    %v2608 = vadd.f32 %v2565, %v2607
    %v2609 = vpop.f32.mrb[0].mxu0
    %v2610 = vadd.f32 %v2567, %v2609
    %2611 = vdwg.mxu0
    %2612 = vmatprep.subr.bf16.mxu0 %v1844
    %2613 = vmatpush1.bf16.msra.mxu0 %v1843
    %2614 = vmatprep.subr.bf16.mxu0 %v1848
    %2615 = vmatpush1.bf16.msra.mxu0 %v1847
    %2616 = vmatprep.subr.bf16.mxu0 %v1852
    %2617 = vmatpush1.bf16.msra.mxu0 %v1851
    %2618 = vmatprep.subr.bf16.mxu0 %v1856
    %2619 = vmatpush1.bf16.msra.mxu0 %v1855
    %2620 = vmatprep.subr.bf16.mxu0 %v1860
    %2621 = vmatpush1.bf16.msra.mxu0 %v1859
    %2622 = vmatprep.subr.bf16.mxu0 %v1864
    %2623 = vmatpush1.bf16.msra.mxu0 %v1863
    %2624 = vmatprep.subr.bf16.mxu0 %v1868
    %2625 = vmatpush1.bf16.msra.mxu0 %v1867
    %2626 = vmatprep.subr.bf16.mxu0 %v1872
    %2627 = vmatpush1.bf16.msra.mxu0 %v1871
    %2628 = vmatprep.subr.bf16.mxu0 %v1876
    %2629 = vmatpush1.bf16.msra.mxu0 %v1875
    %2630 = vmatprep.subr.bf16.mxu0 %v1880
    %2631 = vmatpush1.bf16.msra.mxu0 %v1879
    %2632 = vmatprep.subr.bf16.mxu0 %v1884
    %2633 = vmatpush1.bf16.msra.mxu0 %v1883
    %2634 = vmatprep.subr.bf16.mxu0 %v1888
    %2635 = vmatpush1.bf16.msra.mxu0 %v1887
    %2636 = vmatprep.subr.bf16.mxu0 %v1892
    %2637 = vmatpush1.bf16.msra.mxu0 %v1891
    %2638 = vmatprep.subr.bf16.mxu0 %v1896
    %2639 = vmatpush1.bf16.msra.mxu0 %v1895
    %2640 = vmatprep.subr.bf16.mxu0 %v1900
    %2641 = vmatpush1.bf16.msra.mxu0 %v1899
    %2642 = vmatprep.subr.bf16.mxu0 %v1904
    %2643 = vmatpush1.bf16.msra.mxu0 %v1903
    %2644 = vmatprep.mubr.bf16.mxu0 %v303
    %2645 = vmatmul.mubr.bf16.gmra.mrb[0].mxu0 %v299
    %v2646 = vpop.f32.mrb[0].mxu0
    %v2647 = vadd.f32 %v2604, %v2646
    %v2648 = vpop.f32.mrb[0].mxu0
    %v2649 = vadd.f32 %v2606, %v2648
    %v2650 = vpop.f32.mrb[0].mxu0
    %v2651 = vadd.f32 %v2608, %v2650
    %v2652 = vpop.f32.mrb[0].mxu0
    %v2653 = vadd.f32 %v2610, %v2652
    %2654 = vdwg.mxu0
    %2655 = vst [vmem:[%s4] sm:$0xff] %v2432
    %2656 = vst [vmem:[%s4 + $0x8] sm:$0xff] %v2434
    %2657 = vst [vmem:[%s4 + $0x10] sm:$0xff] %v2647
    %2658 = vst [vmem:[%s4 + $0x18] sm:$0xff] %v2649
    %2659 = vst [vmem:[%s4 + $0x20] sm:$0xff] %v2436
    %2660 = vst [vmem:[%s4 + $0x28] sm:$0xff] %v2438
    %2661 = vst [vmem:[%s4 + $0x30] sm:$0xff] %v2651
    %2662 = vst [vmem:[%s4 + $0x38] sm:$0xff] %v2653
    // Predicated region
    $region30: #{vgg_block2_apply.1} parent=1 // pred_check
      _
    $region31: #{vgg_block2_apply.1} parent=1 // pred_check_branch
      %2664 = sbr.rel (0) target = $region33
    $region32: #{vgg_block2_apply.1} parent=1 // pred_region
      _
    $region33: #{vgg_block2_apply.1} parent=1 // pred_fallthru
      _
    // Predicated region
    $region34: #{vgg_block2_apply.1} parent=1 // pred_check
      _
    $region35: #{vgg_block2_apply.1} parent=1 // pred_check_branch
      %2666 = sbr.rel (0) target = $region37
    $region36: #{vgg_block2_apply.1} parent=1 // pred_region
      _
    $region37: #{vgg_block2_apply.1} parent=1 // pred_fallthru
      _
    %2667 = vsyncpa [#allocation4], 1
    %2668 = vsyncpa [#allocation6], 1

</llo_original>
